<compile_context>
chip_gen: v5e
topology: v5e:2x2
jax: 0.10.0
libtpu: 0.0.40
codegen_flags: <defaults>
</compile_context>

<pallas_src>
import jax
import jax.numpy as jnp
from jax.experimental import pallas as pl
from jax.experimental.pallas import tpu as pltpu


LANES = 128      # lane-dense output width (pad Cout / fc-out to this)
MAX_TILE = 256   # row tile: multiple of 16, <=256 (v5e-friendly, tiny VMEM use)


# ---------------------------------------------------------------------------
# Pallas kernels
# ---------------------------------------------------------------------------
def conv_pool_relu_kernel(p_ref, w_ref, b_ref, o_ref):
    """relu(maxpool2x2(conv(x) + b)) for one row tile.

    p_ref: (4, tile, K) bf16   -- 4 pool-offset im2col patch tiles
    w_ref: (K, 128)    bf16    -- conv weight, Cout zero-padded to 128 lanes
    b_ref: (1, 128)    f32     -- bias, zero-padded
    o_ref: (tile, 128) bf16
    """
    four, tile, k = p_ref.shape
    p = p_ref[...].reshape(four * tile, k)                       # one big matmul
    m = jnp.dot(p, w_ref[...], preferred_element_type=jnp.float32)
    m = jnp.max(m.reshape(four, tile, LANES), axis=0)            # fused max-pool
    o_ref[...] = jnp.maximum(m + b_ref[...], 0.0).astype(o_ref.dtype)


def fc_kernel(x_ref, w_ref, b_ref, o_ref):
    """Linear: (tile, Din) @ (Din, 128) + bias, f32 accumulate/output."""
    o_ref[...] = (
        jnp.dot(x_ref[...], w_ref[...], preferred_element_type=jnp.float32)
        + b_ref[...]
    )


# ---------------------------------------------------------------------------
# Tiling helpers
# ---------------------------------------------------------------------------
def _round_up(n, m):
    return (n + m - 1) // m * m


def _pick_tile(n, max_tile=MAX_TILE):
    """Row tile: multiple of 16, <= max_tile, minimal padding waste."""
    n16 = _round_up(n, 16)
    steps = pl.cdiv(n16, max_tile)
    return _round_up(pl.cdiv(n16, steps), 16)


def _pad_lanes(a, width):
    return jnp.pad(a, ((0, 0), (0, width - a.shape[1])))


# ---------------------------------------------------------------------------
# pallas_call wrappers (row-tiled, "parallel" grid, lane-dense outputs)
# ---------------------------------------------------------------------------
def conv_pool_relu(patches, w_pad, b_pad):
    """patches: (4, N, K) bf16; w_pad: (K, 128) bf16; b_pad: (1, 128) f32."""
    _, n, k = patches.shape
    tile = _pick_tile(n)
    n_pad = _round_up(n, tile)
    if n_pad != n:
        patches = jnp.pad(patches, ((0, 0), (0, n_pad - n), (0, 0)))
    out = pl.pallas_call(
        conv_pool_relu_kernel,
        grid=(n_pad // tile,),
        out_shape=jax.ShapeDtypeStruct((n_pad, LANES), jnp.bfloat16),
        in_specs=[
            pl.BlockSpec((4, tile, k), lambda i: (0, i, 0)),
            pl.BlockSpec((k, LANES), lambda i: (0, 0)),
            pl.BlockSpec((1, LANES), lambda i: (0, 0)),
        ],
        out_specs=pl.BlockSpec((tile, LANES), lambda i: (i, 0)),
        compiler_params=pltpu.CompilerParams(
            dimension_semantics=("parallel",)),
    )(patches, w_pad, b_pad)
    return out[:n]


def fc_layer(x, w_pad, b_pad):
    """x: (B, Din) bf16; w_pad: (Din, 128) bf16; b_pad: (1, 128) f32."""
    n, d_in = x.shape
    tile = _pick_tile(n)
    n_pad = _round_up(n, tile)
    if n_pad != n:
        x = jnp.pad(x, ((0, n_pad - n), (0, 0)))
    out = pl.pallas_call(
        fc_kernel,
        grid=(n_pad // tile,),
        out_shape=jax.ShapeDtypeStruct((n_pad, LANES), jnp.float32),
        in_specs=[
            pl.BlockSpec((tile, d_in), lambda i: (i, 0)),
            pl.BlockSpec((d_in, LANES), lambda i: (0, 0)),
            pl.BlockSpec((1, LANES), lambda i: (0, 0)),
        ],
        out_specs=pl.BlockSpec((tile, LANES), lambda i: (i, 0)),
        compiler_params=pltpu.CompilerParams(
            dimension_semantics=("parallel",)),
    )(x, w_pad, b_pad)
    return out[:n]


# ---------------------------------------------------------------------------
# JAX glue: im2col patches split by 2x2 pool offset (contiguous slab)
# ---------------------------------------------------------------------------
def pool_patches(x_nhwc, k):
    """Return (4, B*PH*PW, C*k*k): 4 pool offsets (major), rows (b, ph, pw),
    columns ordered (c_in, kh, kw) — matches torch weight.reshape(Cout, -1)."""
    B, H, W, C = x_nhwc.shape
    OH, OW = H - k + 1, W - k + 1
    PH, PW = OH // 2, OW // 2
    kk = C * k * k
    pat = jax.lax.conv_general_dilated_patches(
        x_nhwc, (k, k), (1, 1), "VALID",
        dimension_numbers=("NHWC", "HWIO", "NHWC"))      # (B, OH, OW, C*k*k)
    pat = pat[:, :2 * PH, :2 * PW, :]
    pat = pat.reshape(B, PH, 2, PW, 2, kk)
    pat = pat.transpose(2, 4, 0, 1, 3, 5)                # (2, 2, B, PH, PW, kk)
    return pat.reshape(4, B * PH * PW, kk), (PH, PW)


def net_forward(x_nchw, params):
    w1, b1, w2, b2, fcw, fcb = params
    B = x_nchw.shape[0]
    x = jnp.transpose(x_nchw, (0, 2, 3, 1)).astype(jnp.bfloat16)   # NHWC, bf16

    # stage 1: conv1 + pool + relu        28 -> conv 24 -> pool 12
    p1, (ph1, pw1) = pool_patches(x, 5)                    # (4, B*144, 25)
    w1p = _pad_lanes(w1.reshape(10, -1).T.astype(jnp.bfloat16), LANES)
    b1p = _pad_lanes(b1.reshape(1, -1), LANES)
    h1 = conv_pool_relu(p1, w1p, b1p)[:, :10]              # (B*144, 10) bf16
    h1 = h1.reshape(B, ph1, pw1, 10)

    # stage 2: conv2 + pool + relu        12 -> conv 8 -> pool 4
    p2, (ph2, pw2) = pool_patches(h1, 5)                   # (4, B*16, 250)
    w2p = _pad_lanes(w2.reshape(20, -1).T.astype(jnp.bfloat16), LANES)
    b2p = _pad_lanes(b2.reshape(1, -1), LANES)
    h2 = conv_pool_relu(p2, w2p, b2p)[:, :20]              # (B*16, 20) bf16
    h2 = h2.reshape(B, ph2 * pw2 * 20)                     # (B, 320), NHWC order

    # fc: fold torch's NCHW-flatten into the weight (rows reordered to NHWC)
    fcw_perm = (fcw.reshape(10, 20, ph2, pw2)
                   .transpose(2, 3, 1, 0)
                   .reshape(ph2 * pw2 * 20, 10))
    fcwp = _pad_lanes(fcw_perm.astype(jnp.bfloat16), LANES)
    fcbp = _pad_lanes(fcb.reshape(1, -1), LANES)
    return fc_layer(h2, fcwp, fcbp)[:, :10]                # (B, 10) f32


# ---------------------------------------------------------------------------
# Pure-JAX f32 reference (mirrors the torch forward exactly)
# ---------------------------------------------------------------------------
def reference_forward(x_nchw, params):
    w1, b1, w2, b2, fcw, fcb = params

    def conv(x, w, b):
        y = jax.lax.conv_general_dilated(
            x, w, (1, 1), "VALID", dimension_numbers=("NCHW", "OIHW", "NCHW"))
        return y + b.reshape(1, -1, 1, 1)

    def pool(x):
        return jax.lax.reduce_window(
            x, -jnp.inf, jax.lax.max, (1, 1, 2, 2), (1, 1, 2, 2), "VALID")

    x = jnp.maximum(pool(conv(x_nchw, w1, b1)), 0.0)
    x = jnp.maximum(pool(conv(x, w2, b2)), 0.0)
    x = x.reshape(x.shape[0], -1)
    return x @ fcw.T + fcb


if __name__ == "__main__":
    key = jax.random.PRNGKey(0)
    k_x, k_w1, k_b1, k_w2, k_b2, k_fw, k_fb = jax.random.split(key, 7)

    # 28x28 input required so flatten yields 20*4*4 = 320 (as in the torch net)
    x = jax.random.normal(k_x, (2, 1, 28, 28), dtype=jnp.float32)

    w1 = 0.1 * jax.random.normal(k_w1, (10, 1, 5, 5), dtype=jnp.float32)
    b1 = 0.1 * jax.random.normal(k_b1, (10,), dtype=jnp.float32)
    w2 = 0.1 * jax.random.normal(k_w2, (20, 10, 5, 5), dtype=jnp.float32)
    b2 = 0.1 * jax.random.normal(k_b2, (20,), dtype=jnp.float32)
    fcw = 0.1 * jax.random.normal(k_fw, (10, 320), dtype=jnp.float32)
    fcb = 0.1 * jax.random.normal(k_fb, (10,), dtype=jnp.float32)
    params = (w1, b1, w2, b2, fcw, fcb)

    y = jax.jit(net_forward)(x, params)
    y = jax.block_until_ready(y)

    y_ref = reference_forward(x, params)
    assert y.shape == (2, 10), y.shape
    # bf16 inputs/weights (f32 accumulate) -> relaxed tolerance vs f32 reference
    assert jnp.allclose(y, y_ref, rtol=5e-2, atol=5e-2), (
        float(jnp.max(jnp.abs(y - y_ref)))
    )
    print("KERNEL_OK")
</pallas_src>

<mosaic_0001>
module attributes {stable_mosaic.version = 11 : i64} {
  func.func @conv_pool_relu_kernel(%arg0: i32, %arg1: memref<4x144x25xbf16, #tpu.memory_space<vmem>>, %arg2: memref<25x128xbf16, #tpu.memory_space<vmem>>, %arg3: memref<1x128xf32, #tpu.memory_space<vmem>>, %arg4: memref<144x128xbf16, #tpu.memory_space<vmem>>) attributes {dimension_semantics = [#tpu.dimension_semantics<parallel>], iteration_bounds = array<i64: 2>, scalar_prefetch = 0 : i64, scratch_operands = 0 : i64, tpu.core_type = #tpu.core_type<tc>, window_params = [{transform_indices = @transform_0, window_bounds = array<i64: 4, 144, 25>}, {pipeline_mode = #tpu.pipeline_mode<synchronous>, transform_indices = @transform_1, window_bounds = array<i64: 25, 128>}, {pipeline_mode = #tpu.pipeline_mode<synchronous>, transform_indices = @transform_2, window_bounds = array<i64: 1, 128>}, {transform_indices = @transform_3, window_bounds = array<i64: 144, 128>}]} {
    %c0 = arith.constant 0 : index
    %c0_0 = arith.constant 0 : index
    %c0_1 = arith.constant 0 : index
    %0 = vector.load %arg1[%c0, %c0_0, %c0_1] : memref<4x144x25xbf16, #tpu.memory_space<vmem>>, vector<4x144x25xbf16>
    %1 = vector.shape_cast %0 : vector<4x144x25xbf16> to vector<576x25xbf16>
    %c0_2 = arith.constant 0 : index
    %c0_3 = arith.constant 0 : index
    %2 = vector.load %arg2[%c0_2, %c0_3] : memref<25x128xbf16, #tpu.memory_space<vmem>>, vector<25x128xbf16>
    %cst = arith.constant dense<0.000000e+00> : vector<576x128xf32>
    %3 = tpu.matmul %1, %2, %cst {dimension_numbers = #tpu.dot_dimension_numbers<[1], [0], [0], [1], [0, 0, 1, 1], [], []>} : vector<576x25xbf16>, vector<25x128xbf16>, vector<576x128xf32> -> vector<576x128xf32>
    %4 = vector.shape_cast %3 : vector<576x128xf32> to vector<4x144x128xf32>
    %cst_4 = arith.constant dense<0xFF800000> : vector<144x128xf32>
    %5 = vector.multi_reduction <maximumf>, %4, %cst_4 [0] : vector<4x144x128xf32> to vector<144x128xf32>
    %c0_5 = arith.constant 0 : index
    %c0_6 = arith.constant 0 : index
    %6 = vector.load %arg3[%c0_5, %c0_6] : memref<1x128xf32, #tpu.memory_space<vmem>>, vector<1x128xf32>
    %7 = vector.broadcast %6 : vector<1x128xf32> to vector<144x128xf32>
    %8 = arith.addf %5, %7 : vector<144x128xf32>
    %cst_7 = arith.constant 0.000000e+00 : f32
    %9 = vector.broadcast %cst_7 : f32 to vector<144x128xf32>
    %10 = arith.maximumf %8, %9 : vector<144x128xf32>
    %11 = arith.truncf %10 : vector<144x128xf32> to vector<144x128xbf16>
    %c0_8 = arith.constant 0 : index
    %c0_9 = arith.constant 0 : index
    %12 = vector.load %arg4[%c0_8, %c0_9] : memref<144x128xbf16, #tpu.memory_space<vmem>>, vector<144x128xbf16>
    tpu.vector_store %arg4[%c0_8, %c0_9], %11 {strides = array<i32>} : memref<144x128xbf16, #tpu.memory_space<vmem>>, vector<144x128xbf16>,
    return
  }
  func.func @transform_0(%arg0: i32) -> (i32, i32, i32) {
    %c0_i32 = arith.constant 0 : i32
    %c0_i32_0 = arith.constant 0 : i32
    %c0_i32_1 = arith.constant 0 : i32
    return %c0_i32, %arg0, %c0_i32_0 : i32, i32, i32
  }
  func.func @transform_1(%arg0: i32) -> (i32, i32) {
    %c0_i32 = arith.constant 0 : i32
    %c0_i32_0 = arith.constant 0 : i32
    %c0_i32_1 = arith.constant 0 : i32
    return %c0_i32, %c0_i32_0 : i32, i32
  }
  func.func @transform_2(%arg0: i32) -> (i32, i32) {
    %c0_i32 = arith.constant 0 : i32
    %c0_i32_0 = arith.constant 0 : i32
    %c0_i32_1 = arith.constant 0 : i32
    return %c0_i32, %c0_i32_0 : i32, i32
  }
  func.func @transform_3(%arg0: i32) -> (i32, i32) {
    %c0_i32 = arith.constant 0 : i32
    %c0_i32_0 = arith.constant 0 : i32
    return %arg0, %c0_i32 : i32, i32
  }
}

module attributes {stable_mosaic.version = 11 : i64} {
  func.func @conv_pool_relu_kernel(%arg0: i32, %arg1: memref<4x32x250xbf16, #tpu.memory_space<vmem>>, %arg2: memref<250x128xbf16, #tpu.memory_space<vmem>>, %arg3: memref<1x128xf32, #tpu.memory_space<vmem>>, %arg4: memref<32x128xbf16, #tpu.memory_space<vmem>>) attributes {dimension_semantics = [#tpu.dimension_semantics<parallel>], iteration_bounds = array<i64: 1>, scalar_prefetch = 0 : i64, scratch_operands = 0 : i64, tpu.core_type = #tpu.core_type<tc>, window_params = [{transform_indices = @transform_0, window_bounds = array<i64: 4, 32, 250>}, {pipeline_mode = #tpu.pipeline_mode<synchronous>, transform_indices = @transform_1, window_bounds = array<i64: 250, 128>}, {pipeline_mode = #tpu.pipeline_mode<synchronous>, transform_indices = @transform_2, window_bounds = array<i64: 1, 128>}, {transform_indices = @transform_3, window_bounds = array<i64: 32, 128>}]} {
    %c0 = arith.constant 0 : index
    %c0_0 = arith.constant 0 : index
    %c0_1 = arith.constant 0 : index
    %0 = vector.load %arg1[%c0, %c0_0, %c0_1] : memref<4x32x250xbf16, #tpu.memory_space<vmem>>, vector<4x32x250xbf16>
    %1 = vector.shape_cast %0 : vector<4x32x250xbf16> to vector<128x250xbf16>
    %c0_2 = arith.constant 0 : index
    %c0_3 = arith.constant 0 : index
    %2 = vector.load %arg2[%c0_2, %c0_3] : memref<250x128xbf16, #tpu.memory_space<vmem>>, vector<250x128xbf16>
    %cst = arith.constant dense<0.000000e+00> : vector<128x128xf32>
    %3 = tpu.matmul %1, %2, %cst {dimension_numbers = #tpu.dot_dimension_numbers<[1], [0], [0], [1], [0, 0, 1, 1], [], []>} : vector<128x250xbf16>, vector<250x128xbf16>, vector<128x128xf32> -> vector<128x128xf32>
    %4 = vector.shape_cast %3 : vector<128x128xf32> to vector<4x32x128xf32>
    %cst_4 = arith.constant dense<0xFF800000> : vector<32x128xf32>
    %5 = vector.multi_reduction <maximumf>, %4, %cst_4 [0] : vector<4x32x128xf32> to vector<32x128xf32>
    %c0_5 = arith.constant 0 : index
    %c0_6 = arith.constant 0 : index
    %6 = vector.load %arg3[%c0_5, %c0_6] : memref<1x128xf32, #tpu.memory_space<vmem>>, vector<1x128xf32>
    %7 = vector.broadcast %6 : vector<1x128xf32> to vector<32x128xf32>
    %8 = arith.addf %5, %7 : vector<32x128xf32>
    %cst_7 = arith.constant 0.000000e+00 : f32
    %9 = vector.broadcast %cst_7 : f32 to vector<32x128xf32>
    %10 = arith.maximumf %8, %9 : vector<32x128xf32>
    %11 = arith.truncf %10 : vector<32x128xf32> to vector<32x128xbf16>
    %c0_8 = arith.constant 0 : index
    %c0_9 = arith.constant 0 : index
    %12 = vector.load %arg4[%c0_8, %c0_9] : memref<32x128xbf16, #tpu.memory_space<vmem>>, vector<32x128xbf16>
    tpu.vector_store %arg4[%c0_8, %c0_9], %11 {strides = array<i32>} : memref<32x128xbf16, #tpu.memory_space<vmem>>, vector<32x128xbf16>,
    return
  }
  func.func @transform_0(%arg0: i32) -> (i32, i32, i32) {
    %c0_i32 = arith.constant 0 : i32
    %c0_i32_0 = arith.constant 0 : i32
    %c0_i32_1 = arith.constant 0 : i32
    return %c0_i32, %arg0, %c0_i32_0 : i32, i32, i32
  }
  func.func @transform_1(%arg0: i32) -> (i32, i32) {
    %c0_i32 = arith.constant 0 : i32
    %c0_i32_0 = arith.constant 0 : i32
    %c0_i32_1 = arith.constant 0 : i32
    return %c0_i32, %c0_i32_0 : i32, i32
  }
  func.func @transform_2(%arg0: i32) -> (i32, i32) {
    %c0_i32 = arith.constant 0 : i32
    %c0_i32_0 = arith.constant 0 : i32
    %c0_i32_1 = arith.constant 0 : i32
    return %c0_i32, %c0_i32_0 : i32, i32
  }
  func.func @transform_3(%arg0: i32) -> (i32, i32) {
    %c0_i32 = arith.constant 0 : i32
    %c0_i32_0 = arith.constant 0 : i32
    return %arg0, %c0_i32 : i32, i32
  }
}

module attributes {stable_mosaic.version = 11 : i64} {
  func.func @fc_kernel(%arg0: i32, %arg1: memref<16x320xbf16, #tpu.memory_space<vmem>>, %arg2: memref<320x128xbf16, #tpu.memory_space<vmem>>, %arg3: memref<1x128xf32, #tpu.memory_space<vmem>>, %arg4: memref<16x128xf32, #tpu.memory_space<vmem>>) attributes {dimension_semantics = [#tpu.dimension_semantics<parallel>], iteration_bounds = array<i64: 1>, scalar_prefetch = 0 : i64, scratch_operands = 0 : i64, tpu.core_type = #tpu.core_type<tc>, window_params = [{transform_indices = @transform_0, window_bounds = array<i64: 16, 320>}, {pipeline_mode = #tpu.pipeline_mode<synchronous>, transform_indices = @transform_1, window_bounds = array<i64: 320, 128>}, {pipeline_mode = #tpu.pipeline_mode<synchronous>, transform_indices = @transform_2, window_bounds = array<i64: 1, 128>}, {transform_indices = @transform_3, window_bounds = array<i64: 16, 128>}]} {
    %c0 = arith.constant 0 : index
    %c0_0 = arith.constant 0 : index
    %0 = vector.load %arg1[%c0, %c0_0] : memref<16x320xbf16, #tpu.memory_space<vmem>>, vector<16x320xbf16>
    %c0_1 = arith.constant 0 : index
    %c0_2 = arith.constant 0 : index
    %1 = vector.load %arg2[%c0_1, %c0_2] : memref<320x128xbf16, #tpu.memory_space<vmem>>, vector<320x128xbf16>
    %cst = arith.constant dense<0.000000e+00> : vector<16x128xf32>
    %2 = tpu.matmul %0, %1, %cst {dimension_numbers = #tpu.dot_dimension_numbers<[1], [0], [0], [1], [0, 0, 1, 1], [], []>} : vector<16x320xbf16>, vector<320x128xbf16>, vector<16x128xf32> -> vector<16x128xf32>
    %c0_3 = arith.constant 0 : index
    %c0_4 = arith.constant 0 : index
    %3 = vector.load %arg3[%c0_3, %c0_4] : memref<1x128xf32, #tpu.memory_space<vmem>>, vector<1x128xf32>
    %4 = vector.broadcast %3 : vector<1x128xf32> to vector<16x128xf32>
    %5 = arith.addf %2, %4 : vector<16x128xf32>
    %c0_5 = arith.constant 0 : index
    %c0_6 = arith.constant 0 : index
    %6 = vector.load %arg4[%c0_5, %c0_6] : memref<16x128xf32, #tpu.memory_space<vmem>>, vector<16x128xf32>
    tpu.vector_store %arg4[%c0_5, %c0_6], %5 {strides = array<i32>} : memref<16x128xf32, #tpu.memory_space<vmem>>, vector<16x128xf32>,
    return
  }
  func.func @transform_0(%arg0: i32) -> (i32, i32) {
    %c0_i32 = arith.constant 0 : i32
    %c0_i32_0 = arith.constant 0 : i32
    return %arg0, %c0_i32 : i32, i32
  }
  func.func @transform_1(%arg0: i32) -> (i32, i32) {
    %c0_i32 = arith.constant 0 : i32
    %c0_i32_0 = arith.constant 0 : i32
    %c0_i32_1 = arith.constant 0 : i32
    return %c0_i32, %c0_i32_0 : i32, i32
  }
  func.func @transform_2(%arg0: i32) -> (i32, i32) {
    %c0_i32 = arith.constant 0 : i32
    %c0_i32_0 = arith.constant 0 : i32
    %c0_i32_1 = arith.constant 0 : i32
    return %c0_i32, %c0_i32_0 : i32, i32
  }
  func.func @transform_3(%arg0: i32) -> (i32, i32) {
    %c0_i32 = arith.constant 0 : i32
    %c0_i32_0 = arith.constant 0 : i32
    return %arg0, %c0_i32 : i32, i32
  }
}

</mosaic_0001>

<llo_original>
// kernel: net_forward.3
$region0: #{net_forward.3}
  #allocation0 [shape = 'u32[]', space=smem, size = 0x4, offset = 0x4, fixed_abs, tag = 'smem constant byte address 0x4 - core index']
  #allocation1 [shape = 'u32[72,128]{1,0:T(1,128)}', space=vmem, size = 0x9000, scoped, tag = 'internal scratch']
  %s0 = inlined_call_operand.vmem [shape: bf16[4,288,25], index: 0, kind: input, shape index: {}]
  %s1 = inlined_call_operand.vmem [shape: bf16[25,128], index: 1, kind: input, shape index: {}]
  %s2 = inlined_call_operand.vmem [shape: f32[1,128], index: 2, kind: input, shape index: {}]
  %s3 = inlined_call_operand.vmem [shape: bf16[288,128], index: 3, kind: output, shape index: {}]
  %s4 = sld [smem:[#allocation0]]
  $region86: #{net_forward.3} parent=0
    _
  %s6 = ssub.s32 1, %s4
  %s7 = scalar_select 0, %s6, %s4
  $region1: #{net_forward.3} parent=0
    #allocation2 [shape = 'u8[294912]{0}', space=vmem, size = 0x48000, scoped, tag = 'input window, operand 0']
    loop: start=0, step=1, limit=4
    $region2: #{net_forward.3} parent=1 // loop_pre_header
      _
    $region3: #{net_forward.3} parent=1 // loop_header
      %s9 = sphi 0, %s13
      %p10 = scmp.ge.s32.totalorder %s9, 4
      %s19 = sphi 0, %s21
      %s22 = sphi 0, %s19
      %s23 = sphi 0, %s22
      %s39 = sphi 0, %s23
      %s43 = sphi 0, %s43
      %s45 = sphi 0, %s43
      %s46 = sphi 0, %s45
      %s60 = sphi 0, %s46
      %s64 = sphi 0, %s64
      %s66 = sphi 0, %s64
      %s67 = sphi 0, %s66
      %s81 = sphi 0, %s67
      %s87 = sphi 0, %s89
      %s90 = sphi 0, %s87
      %s91 = sphi 0, %s90
      %s107 = sphi 0, %s91
    $region4: #{net_forward.3} parent=1 // loop_header_branch
      %12 = sbr.rel (%p10) target = $region8
    $region5: #{net_forward.3} parent=1 // loop_body
      %s14 = ssub.s32 %s9, 1
      %s15 = ssub.s32 %s9, 2
      %s16 = sadd.s32 %s9, 1
      %s17 = ssub.s32 %s9, %s16
      %p18 = scmp.eq.s32.totalorder %s17, 0
      %s20 = sadd.s32 %s19, 1
      %s21 = scalar_select %p18, %s19, %s20
      %p24 = pneg %p18
      %p25 = scmp.eq.s32.totalorder %s9, 1
      %p26 = por %p24, %p25
      %p27 = scmp.ne.s32.totalorder %s19, %s22
      %p28 = scmp.eq.s32.totalorder %s9, 0
      %p29 = por %p27, %p28
      %p30 = scmp.ne.s32.totalorder %s19, %s22
      %p31 = scmp.eq.s32.totalorder %s14, 1
      %p32 = por %p30, %p31
      %p33 = scmp.ne.s32.totalorder %s22, %s23
      %p34 = scmp.eq.s32.totalorder %s14, 0
      %p35 = por %p33, %p34
      %p36 = scmp.ne.s32.totalorder %s22, %s23
      %p37 = scmp.eq.s32.totalorder %s15, 1
      %p38 = por %p36, %p37
      %p40 = scmp.ne.s32.totalorder %s23, %s39
      %p41 = scmp.eq.s32.totalorder %s15, 0
      %p42 = por %p40, %p41
      %s44 = sadd.s32 %s43, 1
      %p47 = scmp.eq.s32.totalorder %s9, 1
      %p48 = scmp.ne.s32.totalorder %s43, %s45
      %p49 = scmp.eq.s32.totalorder %s9, 0
      %p50 = por %p48, %p49
      %p51 = scmp.ne.s32.totalorder %s43, %s45
      %p52 = scmp.eq.s32.totalorder %s14, 1
      %p53 = por %p51, %p52
      %p54 = scmp.ne.s32.totalorder %s45, %s46
      %p55 = scmp.eq.s32.totalorder %s14, 0
      %p56 = por %p54, %p55
      %p57 = scmp.ne.s32.totalorder %s45, %s46
      %p58 = scmp.eq.s32.totalorder %s15, 1
      %p59 = por %p57, %p58
      %p61 = scmp.ne.s32.totalorder %s46, %s60
      %p62 = scmp.eq.s32.totalorder %s15, 0
      %p63 = por %p61, %p62
      %s65 = sadd.s32 %s64, 1
      %p68 = scmp.eq.s32.totalorder %s9, 1
      %p69 = scmp.ne.s32.totalorder %s64, %s66
      %p70 = scmp.eq.s32.totalorder %s9, 0
      %p71 = por %p69, %p70
      %p72 = scmp.ne.s32.totalorder %s64, %s66
      %p73 = scmp.eq.s32.totalorder %s14, 1
      %p74 = por %p72, %p73
      %p75 = scmp.ne.s32.totalorder %s66, %s67
      %p76 = scmp.eq.s32.totalorder %s14, 0
      %p77 = por %p75, %p76
      %p78 = scmp.ne.s32.totalorder %s66, %s67
      %p79 = scmp.eq.s32.totalorder %s15, 1
      %p80 = por %p78, %p79
      %p82 = scmp.ne.s32.totalorder %s67, %s81
      %p83 = scmp.eq.s32.totalorder %s15, 0
      %p84 = por %p82, %p83
      %s85 = ssub.s32 %s9, %s16
      %p86 = scmp.eq.s32.totalorder %s85, 0
      %s88 = sadd.s32 %s87, 1
      %s89 = scalar_select %p86, %s87, %s88
      %p92 = pneg %p86
      %p93 = scmp.eq.s32.totalorder %s9, 1
      %p94 = por %p92, %p93
      %p95 = scmp.ne.s32.totalorder %s87, %s90
      %p96 = scmp.eq.s32.totalorder %s9, 0
      %p97 = por %p95, %p96
      %p98 = scmp.ne.s32.totalorder %s87, %s90
      %p99 = scmp.eq.s32.totalorder %s14, 1
      %p100 = por %p98, %p99
      %p101 = scmp.ne.s32.totalorder %s90, %s91
      %p102 = scmp.eq.s32.totalorder %s14, 0
      %p103 = por %p101, %p102
      %p104 = scmp.ne.s32.totalorder %s90, %s91
      %p105 = scmp.eq.s32.totalorder %s15, 1
      %p106 = por %p104, %p105
      %p108 = scmp.ne.s32.totalorder %s91, %s107
      %p109 = scmp.eq.s32.totalorder %s15, 0
      %p110 = por %p108, %p109
      %p111 = scmp.le.s32.totalorder 1, %s9
      %p112 = scmp.lt.s32.totalorder %s9, 3
      %p113 = pnand %p111, %p112
      %p114 = pneg %p113
      // Predicated region
      $region9: #{net_forward.3} parent=5 // pred_check
        _
      $region10: #{net_forward.3} parent=5 // pred_check_branch
        %116 = sbr.rel (%p113) target = $region12
      $region11: #{net_forward.3} parent=5 // pred_region
        %s117 = ssub.s32 %s9, 1
        // Predicated region
        $region13: #{net_forward.3} parent=11 // pred_check
          %p118 = pneg %p56
        $region14: #{net_forward.3} parent=11 // pred_check_branch
          %120 = sbr.rel (%p118) target = $region16
        $region15: #{net_forward.3} parent=11 // pred_region
          _
        $region16: #{net_forward.3} parent=11 // pred_fallthru
          _
        // Predicated region
        $region17: #{net_forward.3} parent=11 // pred_check
          %p121 = pneg %p77
        $region18: #{net_forward.3} parent=11 // pred_check_branch
          %123 = sbr.rel (%p121) target = $region20
        $region19: #{net_forward.3} parent=11 // pred_region
          _
        $region20: #{net_forward.3} parent=11 // pred_fallthru
          _
      $region12: #{net_forward.3} parent=5 // pred_fallthru
        _
      %p124 = scmp.lt.s32.totalorder %s9, 2
      // Predicated region
      $region21: #{net_forward.3} parent=5 // pred_check
        %p125 = pneg %p124
      $region22: #{net_forward.3} parent=5 // pred_check_branch
        %127 = sbr.rel (%p125) target = $region24
      $region23: #{net_forward.3} parent=5 // pred_region
        // Predicated region
        $region25: #{net_forward.3} parent=23 // pred_check
          %p128 = pneg %p29
        $region26: #{net_forward.3} parent=23 // pred_check_branch
          %130 = sbr.rel (%p128) target = $region28
        $region27: #{net_forward.3} parent=23 // pred_region
          %s131 = sand.u32 %s19, 1
          %s132 = sand.u32 %s19, 1
          %s133 = smul.addr %s132, 288
          %s134 = scalar_lea.vmem [#allocation2], %s133
          %s135 = smul.u32 18, %s9
          %s136 = smul.addr %s135, 4
          %s137 = scalar_lea.vmem %s0, %s136
          // Predicated region
          $region29: #{net_forward.3} parent=27 // pred_check
            _
          $region30: #{net_forward.3} parent=27 // pred_check_branch
            %139 = sbr.rel (0) target = $region32
          $region31: #{net_forward.3} parent=27 // pred_region
            // Predicated region
            $region33: #{net_forward.3} parent=31 // pred_check
              _
            $region34: #{net_forward.3} parent=31 // pred_check_branch
              %141 = sbr.rel target = $region36
            $region35: #{net_forward.3} parent=31 // pred_region
              // Predicated region
              $region48: #{net_forward.3} parent=35 // pred_check
                _
              $region49: #{net_forward.3} parent=35 // pred_check_branch
                %299 = sbr.rel (0) target = $region51
              $region50: #{net_forward.3} parent=35 // pred_region
                loop: start=0, step=1, limit=1
                $region52: #{net_forward.3} parent=50 // loop_pre_header
                  _
                $region53: #{net_forward.3} parent=50 // loop_header
                  %s301 = sphi 0, %s305
                  %p302 = scmp.ge.s32.totalorder %s301, 1
                  %s306 = sphi %s137, %s137
                  %s307 = sphi %s134, %s134
                $region54: #{net_forward.3} parent=50 // loop_header_branch
                  %304 = sbr.rel (%p302) target = $region58
                $region55: #{net_forward.3} parent=50 // loop_body
                  _
                $region56: #{net_forward.3} parent=50 // loop_footer
                  %s305 = sadd.s32 1, %s301
                $region57: #{net_forward.3} parent=50 // loop_footer_branch
                  %300 = sbr.rel target = $region53
                $region58: #{net_forward.3} parent=50 // loop_exit
                  _
                %s309 = ssub.s32 16, 1
                loop: start=0, step=1, limit=1
                $region59: #{net_forward.3} parent=50 // loop_pre_header
                  _
                $region60: #{net_forward.3} parent=50 // loop_header
                  %s311 = sphi 0, %s315
                  %p312 = scmp.ge.s32.totalorder %s311, 1
                  %s316 = sphi %s137, %s137
                  %s317 = sphi %s134, %s134
                $region61: #{net_forward.3} parent=50 // loop_header_branch
                  %314 = sbr.rel (%p312) target = $region65
                $region62: #{net_forward.3} parent=50 // loop_body
                  %v318 = vld [vmem:[%s316] sm:%s309]
                  %319 = vst [vmem:[%s317] sm:%s309] %v318
                  %v320 = vld [vmem:[%s316 + $0x4] sm:%s309]
                  %321 = vst [vmem:[%s317 + $0x4] sm:%s309] %v320
                  %v322 = vld [vmem:[%s316 + $0x8] sm:%s309]
                  %323 = vst [vmem:[%s317 + $0x8] sm:%s309] %v322
                  %v324 = vld [vmem:[%s316 + $0xc] sm:%s309]
                  %325 = vst [vmem:[%s317 + $0xc] sm:%s309] %v324
                  %v326 = vld [vmem:[%s316 + $0x10] sm:%s309]
                  %327 = vst [vmem:[%s317 + $0x10] sm:%s309] %v326
                  %v328 = vld [vmem:[%s316 + $0x14] sm:%s309]
                  %329 = vst [vmem:[%s317 + $0x14] sm:%s309] %v328
                  %v330 = vld [vmem:[%s316 + $0x18] sm:%s309]
                  %331 = vst [vmem:[%s317 + $0x18] sm:%s309] %v330
                  %v332 = vld [vmem:[%s316 + $0x1c] sm:%s309]
                  %333 = vst [vmem:[%s317 + $0x1c] sm:%s309] %v332
                  %v334 = vld [vmem:[%s316 + $0x20] sm:%s309]
                  %335 = vst [vmem:[%s317 + $0x20] sm:%s309] %v334
                  %v336 = vld [vmem:[%s316 + $0x24] sm:%s309]
                  %337 = vst [vmem:[%s317 + $0x24] sm:%s309] %v336
                  %v338 = vld [vmem:[%s316 + $0x28] sm:%s309]
                  %339 = vst [vmem:[%s317 + $0x28] sm:%s309] %v338
                  %v340 = vld [vmem:[%s316 + $0x2c] sm:%s309]
                  %341 = vst [vmem:[%s317 + $0x2c] sm:%s309] %v340
                  %v342 = vld [vmem:[%s316 + $0x30] sm:%s309]
                  %343 = vst [vmem:[%s317 + $0x30] sm:%s309] %v342
                  %v344 = vld [vmem:[%s316 + $0x34] sm:%s309]
                  %345 = vst [vmem:[%s317 + $0x34] sm:%s309] %v344
                  %v346 = vld [vmem:[%s316 + $0x38] sm:%s309]
                  %347 = vst [vmem:[%s317 + $0x38] sm:%s309] %v346
                  %v348 = vld [vmem:[%s316 + $0x3c] sm:%s309]
                  %349 = vst [vmem:[%s317 + $0x3c] sm:%s309] %v348
                  %v350 = vld [vmem:[%s316 + $0x40] sm:%s309]
                  %351 = vst [vmem:[%s317 + $0x40] sm:%s309] %v350
                  %v352 = vld [vmem:[%s316 + $0x44] sm:%s309]
                  %353 = vst [vmem:[%s317 + $0x44] sm:%s309] %v352
                  %v354 = vld [vmem:[%s316 + $0x90] sm:%s309]
                  %355 = vst [vmem:[%s317 + $0x48] sm:%s309] %v354
                  %v356 = vld [vmem:[%s316 + $0x94] sm:%s309]
                  %357 = vst [vmem:[%s317 + $0x4c] sm:%s309] %v356
                  %v358 = vld [vmem:[%s316 + $0x98] sm:%s309]
                  %359 = vst [vmem:[%s317 + $0x50] sm:%s309] %v358
                  %v360 = vld [vmem:[%s316 + $0x9c] sm:%s309]
                  %361 = vst [vmem:[%s317 + $0x54] sm:%s309] %v360
                  %v362 = vld [vmem:[%s316 + $0xa0] sm:%s309]
                  %363 = vst [vmem:[%s317 + $0x58] sm:%s309] %v362
                  %v364 = vld [vmem:[%s316 + $0xa4] sm:%s309]
                  %365 = vst [vmem:[%s317 + $0x5c] sm:%s309] %v364
                  %v366 = vld [vmem:[%s316 + $0xa8] sm:%s309]
                  %367 = vst [vmem:[%s317 + $0x60] sm:%s309] %v366
                  %v368 = vld [vmem:[%s316 + $0xac] sm:%s309]
                  %369 = vst [vmem:[%s317 + $0x64] sm:%s309] %v368
                  %v370 = vld [vmem:[%s316 + $0xb0] sm:%s309]
                  %371 = vst [vmem:[%s317 + $0x68] sm:%s309] %v370
                  %v372 = vld [vmem:[%s316 + $0xb4] sm:%s309]
                  %373 = vst [vmem:[%s317 + $0x6c] sm:%s309] %v372
                  %v374 = vld [vmem:[%s316 + $0xb8] sm:%s309]
                  %375 = vst [vmem:[%s317 + $0x70] sm:%s309] %v374
                  %v376 = vld [vmem:[%s316 + $0xbc] sm:%s309]
                  %377 = vst [vmem:[%s317 + $0x74] sm:%s309] %v376
                  %v378 = vld [vmem:[%s316 + $0xc0] sm:%s309]
                  %379 = vst [vmem:[%s317 + $0x78] sm:%s309] %v378
                  %v380 = vld [vmem:[%s316 + $0xc4] sm:%s309]
                  %381 = vst [vmem:[%s317 + $0x7c] sm:%s309] %v380
                  %v382 = vld [vmem:[%s316 + $0xc8] sm:%s309]
                  %383 = vst [vmem:[%s317 + $0x80] sm:%s309] %v382
                  %v384 = vld [vmem:[%s316 + $0xcc] sm:%s309]
                  %385 = vst [vmem:[%s317 + $0x84] sm:%s309] %v384
                  %v386 = vld [vmem:[%s316 + $0xd0] sm:%s309]
                  %387 = vst [vmem:[%s317 + $0x88] sm:%s309] %v386
                  %v388 = vld [vmem:[%s316 + $0xd4] sm:%s309]
                  %389 = vst [vmem:[%s317 + $0x8c] sm:%s309] %v388
                  %v390 = vld [vmem:[%s316 + $0x120] sm:%s309]
                  %391 = vst [vmem:[%s317 + $0x90] sm:%s309] %v390
                  %v392 = vld [vmem:[%s316 + $0x124] sm:%s309]
                  %393 = vst [vmem:[%s317 + $0x94] sm:%s309] %v392
                  %v394 = vld [vmem:[%s316 + $0x128] sm:%s309]
                  %395 = vst [vmem:[%s317 + $0x98] sm:%s309] %v394
                  %v396 = vld [vmem:[%s316 + $0x12c] sm:%s309]
                  %397 = vst [vmem:[%s317 + $0x9c] sm:%s309] %v396
                  %v398 = vld [vmem:[%s316 + $0x130] sm:%s309]
                  %399 = vst [vmem:[%s317 + $0xa0] sm:%s309] %v398
                  %v400 = vld [vmem:[%s316 + $0x134] sm:%s309]
                  %401 = vst [vmem:[%s317 + $0xa4] sm:%s309] %v400
                  %v402 = vld [vmem:[%s316 + $0x138] sm:%s309]
                  %403 = vst [vmem:[%s317 + $0xa8] sm:%s309] %v402
                  %v404 = vld [vmem:[%s316 + $0x13c] sm:%s309]
                  %405 = vst [vmem:[%s317 + $0xac] sm:%s309] %v404
                  %v406 = vld [vmem:[%s316 + $0x140] sm:%s309]
                  %407 = vst [vmem:[%s317 + $0xb0] sm:%s309] %v406
                  %v408 = vld [vmem:[%s316 + $0x144] sm:%s309]
                  %409 = vst [vmem:[%s317 + $0xb4] sm:%s309] %v408
                  %v410 = vld [vmem:[%s316 + $0x148] sm:%s309]
                  %411 = vst [vmem:[%s317 + $0xb8] sm:%s309] %v410
                  %v412 = vld [vmem:[%s316 + $0x14c] sm:%s309]
                  %413 = vst [vmem:[%s317 + $0xbc] sm:%s309] %v412
                  %v414 = vld [vmem:[%s316 + $0x150] sm:%s309]
                  %415 = vst [vmem:[%s317 + $0xc0] sm:%s309] %v414
                  %v416 = vld [vmem:[%s316 + $0x154] sm:%s309]
                  %417 = vst [vmem:[%s317 + $0xc4] sm:%s309] %v416
                  %v418 = vld [vmem:[%s316 + $0x158] sm:%s309]
                  %419 = vst [vmem:[%s317 + $0xc8] sm:%s309] %v418
                  %v420 = vld [vmem:[%s316 + $0x15c] sm:%s309]
                  %421 = vst [vmem:[%s317 + $0xcc] sm:%s309] %v420
                  %v422 = vld [vmem:[%s316 + $0x160] sm:%s309]
                  %423 = vst [vmem:[%s317 + $0xd0] sm:%s309] %v422
                  %v424 = vld [vmem:[%s316 + $0x164] sm:%s309]
                  %425 = vst [vmem:[%s317 + $0xd4] sm:%s309] %v424
                  %v426 = vld [vmem:[%s316 + $0x1b0] sm:%s309]
                  %427 = vst [vmem:[%s317 + $0xd8] sm:%s309] %v426
                  %v428 = vld [vmem:[%s316 + $0x1b4] sm:%s309]
                  %429 = vst [vmem:[%s317 + $0xdc] sm:%s309] %v428
                  %v430 = vld [vmem:[%s316 + $0x1b8] sm:%s309]
                  %431 = vst [vmem:[%s317 + $0xe0] sm:%s309] %v430
                  %v432 = vld [vmem:[%s316 + $0x1bc] sm:%s309]
                  %433 = vst [vmem:[%s317 + $0xe4] sm:%s309] %v432
                  %v434 = vld [vmem:[%s316 + $0x1c0] sm:%s309]
                  %435 = vst [vmem:[%s317 + $0xe8] sm:%s309] %v434
                  %v436 = vld [vmem:[%s316 + $0x1c4] sm:%s309]
                  %437 = vst [vmem:[%s317 + $0xec] sm:%s309] %v436
                  %v438 = vld [vmem:[%s316 + $0x1c8] sm:%s309]
                  %439 = vst [vmem:[%s317 + $0xf0] sm:%s309] %v438
                  %v440 = vld [vmem:[%s316 + $0x1cc] sm:%s309]
                  %441 = vst [vmem:[%s317 + $0xf4] sm:%s309] %v440
                  %v442 = vld [vmem:[%s316 + $0x1d0] sm:%s309]
                  %443 = vst [vmem:[%s317 + $0xf8] sm:%s309] %v442
                  %v444 = vld [vmem:[%s316 + $0x1d4] sm:%s309]
                  %445 = vst [vmem:[%s317 + $0xfc] sm:%s309] %v444
                  %v446 = vld [vmem:[%s316 + $0x1d8] sm:%s309]
                  %447 = vst [vmem:[%s317 + $0x100] sm:%s309] %v446
                  %v448 = vld [vmem:[%s316 + $0x1dc] sm:%s309]
                  %449 = vst [vmem:[%s317 + $0x104] sm:%s309] %v448
                  %v450 = vld [vmem:[%s316 + $0x1e0] sm:%s309]
                  %451 = vst [vmem:[%s317 + $0x108] sm:%s309] %v450
                  %v452 = vld [vmem:[%s316 + $0x1e4] sm:%s309]
                  %453 = vst [vmem:[%s317 + $0x10c] sm:%s309] %v452
                  %v454 = vld [vmem:[%s316 + $0x1e8] sm:%s309]
                  %455 = vst [vmem:[%s317 + $0x110] sm:%s309] %v454
                  %v456 = vld [vmem:[%s316 + $0x1ec] sm:%s309]
                  %457 = vst [vmem:[%s317 + $0x114] sm:%s309] %v456
                  %v458 = vld [vmem:[%s316 + $0x1f0] sm:%s309]
                  %459 = vst [vmem:[%s317 + $0x118] sm:%s309] %v458
                  %v460 = vld [vmem:[%s316 + $0x1f4] sm:%s309]
                  %461 = vst [vmem:[%s317 + $0x11c] sm:%s309] %v460
                $region63: #{net_forward.3} parent=50 // loop_footer
                  %s315 = sadd.s32 1, %s311
                $region64: #{net_forward.3} parent=50 // loop_footer_branch
                  %310 = sbr.rel target = $region60
                $region65: #{net_forward.3} parent=50 // loop_exit
                  _
              $region51: #{net_forward.3} parent=35 // pred_fallthru
                _
            $region36: #{net_forward.3} parent=31 // pred_fallthru
              _
            // Predicated region
            $region37: #{net_forward.3} parent=31 // pred_check
              _
            $region38: #{net_forward.3} parent=31 // pred_check_branch
              %143 = sbr.rel (0) target = $region40
            $region39: #{net_forward.3} parent=31 // pred_region
              %s145 = ssub.s32 16, 1
              loop: start=0, step=1, limit=1
              $region41: #{net_forward.3} parent=39 // loop_pre_header
                _
              $region42: #{net_forward.3} parent=39 // loop_header
                %s147 = sphi 0, %s151
                %p148 = scmp.ge.s32.totalorder %s147, 1
                %s152 = sphi %s137, %s137
                %s153 = sphi %s134, %s134
              $region43: #{net_forward.3} parent=39 // loop_header_branch
                %150 = sbr.rel (%p148) target = $region47
              $region44: #{net_forward.3} parent=39 // loop_body
                %v154 = vld [vmem:[%s152] sm:%s145]
                %155 = vst [vmem:[%s153] sm:%s145] %v154
                %v156 = vld [vmem:[%s152 + $0x4] sm:%s145]
                %157 = vst [vmem:[%s153 + $0x4] sm:%s145] %v156
                %v158 = vld [vmem:[%s152 + $0x8] sm:%s145]
                %159 = vst [vmem:[%s153 + $0x8] sm:%s145] %v158
                %v160 = vld [vmem:[%s152 + $0xc] sm:%s145]
                %161 = vst [vmem:[%s153 + $0xc] sm:%s145] %v160
                %v162 = vld [vmem:[%s152 + $0x10] sm:%s145]
                %163 = vst [vmem:[%s153 + $0x10] sm:%s145] %v162
                %v164 = vld [vmem:[%s152 + $0x14] sm:%s145]
                %165 = vst [vmem:[%s153 + $0x14] sm:%s145] %v164
                %v166 = vld [vmem:[%s152 + $0x18] sm:%s145]
                %167 = vst [vmem:[%s153 + $0x18] sm:%s145] %v166
                %v168 = vld [vmem:[%s152 + $0x1c] sm:%s145]
                %169 = vst [vmem:[%s153 + $0x1c] sm:%s145] %v168
                %v170 = vld [vmem:[%s152 + $0x20] sm:%s145]
                %171 = vst [vmem:[%s153 + $0x20] sm:%s145] %v170
                %v172 = vld [vmem:[%s152 + $0x24] sm:%s145]
                %173 = vst [vmem:[%s153 + $0x24] sm:%s145] %v172
                %v174 = vld [vmem:[%s152 + $0x28] sm:%s145]
                %175 = vst [vmem:[%s153 + $0x28] sm:%s145] %v174
                %v176 = vld [vmem:[%s152 + $0x2c] sm:%s145]
                %177 = vst [vmem:[%s153 + $0x2c] sm:%s145] %v176
                %v178 = vld [vmem:[%s152 + $0x30] sm:%s145]
                %179 = vst [vmem:[%s153 + $0x30] sm:%s145] %v178
                %v180 = vld [vmem:[%s152 + $0x34] sm:%s145]
                %181 = vst [vmem:[%s153 + $0x34] sm:%s145] %v180
                %v182 = vld [vmem:[%s152 + $0x38] sm:%s145]
                %183 = vst [vmem:[%s153 + $0x38] sm:%s145] %v182
                %v184 = vld [vmem:[%s152 + $0x3c] sm:%s145]
                %185 = vst [vmem:[%s153 + $0x3c] sm:%s145] %v184
                %v186 = vld [vmem:[%s152 + $0x40] sm:%s145]
                %187 = vst [vmem:[%s153 + $0x40] sm:%s145] %v186
                %v188 = vld [vmem:[%s152 + $0x44] sm:%s145]
                %189 = vst [vmem:[%s153 + $0x44] sm:%s145] %v188
                %v190 = vld [vmem:[%s152 + $0x90] sm:%s145]
                %191 = vst [vmem:[%s153 + $0x48] sm:%s145] %v190
                %v192 = vld [vmem:[%s152 + $0x94] sm:%s145]
                %193 = vst [vmem:[%s153 + $0x4c] sm:%s145] %v192
                %v194 = vld [vmem:[%s152 + $0x98] sm:%s145]
                %195 = vst [vmem:[%s153 + $0x50] sm:%s145] %v194
                %v196 = vld [vmem:[%s152 + $0x9c] sm:%s145]
                %197 = vst [vmem:[%s153 + $0x54] sm:%s145] %v196
                %v198 = vld [vmem:[%s152 + $0xa0] sm:%s145]
                %199 = vst [vmem:[%s153 + $0x58] sm:%s145] %v198
                %v200 = vld [vmem:[%s152 + $0xa4] sm:%s145]
                %201 = vst [vmem:[%s153 + $0x5c] sm:%s145] %v200
                %v202 = vld [vmem:[%s152 + $0xa8] sm:%s145]
                %203 = vst [vmem:[%s153 + $0x60] sm:%s145] %v202
                %v204 = vld [vmem:[%s152 + $0xac] sm:%s145]
                %205 = vst [vmem:[%s153 + $0x64] sm:%s145] %v204
                %v206 = vld [vmem:[%s152 + $0xb0] sm:%s145]
                %207 = vst [vmem:[%s153 + $0x68] sm:%s145] %v206
                %v208 = vld [vmem:[%s152 + $0xb4] sm:%s145]
                %209 = vst [vmem:[%s153 + $0x6c] sm:%s145] %v208
                %v210 = vld [vmem:[%s152 + $0xb8] sm:%s145]
                %211 = vst [vmem:[%s153 + $0x70] sm:%s145] %v210
                %v212 = vld [vmem:[%s152 + $0xbc] sm:%s145]
                %213 = vst [vmem:[%s153 + $0x74] sm:%s145] %v212
                %v214 = vld [vmem:[%s152 + $0xc0] sm:%s145]
                %215 = vst [vmem:[%s153 + $0x78] sm:%s145] %v214
                %v216 = vld [vmem:[%s152 + $0xc4] sm:%s145]
                %217 = vst [vmem:[%s153 + $0x7c] sm:%s145] %v216
                %v218 = vld [vmem:[%s152 + $0xc8] sm:%s145]
                %219 = vst [vmem:[%s153 + $0x80] sm:%s145] %v218
                %v220 = vld [vmem:[%s152 + $0xcc] sm:%s145]
                %221 = vst [vmem:[%s153 + $0x84] sm:%s145] %v220
                %v222 = vld [vmem:[%s152 + $0xd0] sm:%s145]
                %223 = vst [vmem:[%s153 + $0x88] sm:%s145] %v222
                %v224 = vld [vmem:[%s152 + $0xd4] sm:%s145]
                %225 = vst [vmem:[%s153 + $0x8c] sm:%s145] %v224
                %v226 = vld [vmem:[%s152 + $0x120] sm:%s145]
                %227 = vst [vmem:[%s153 + $0x90] sm:%s145] %v226
                %v228 = vld [vmem:[%s152 + $0x124] sm:%s145]
                %229 = vst [vmem:[%s153 + $0x94] sm:%s145] %v228
                %v230 = vld [vmem:[%s152 + $0x128] sm:%s145]
                %231 = vst [vmem:[%s153 + $0x98] sm:%s145] %v230
                %v232 = vld [vmem:[%s152 + $0x12c] sm:%s145]
                %233 = vst [vmem:[%s153 + $0x9c] sm:%s145] %v232
                %v234 = vld [vmem:[%s152 + $0x130] sm:%s145]
                %235 = vst [vmem:[%s153 + $0xa0] sm:%s145] %v234
                %v236 = vld [vmem:[%s152 + $0x134] sm:%s145]
                %237 = vst [vmem:[%s153 + $0xa4] sm:%s145] %v236
                %v238 = vld [vmem:[%s152 + $0x138] sm:%s145]
                %239 = vst [vmem:[%s153 + $0xa8] sm:%s145] %v238
                %v240 = vld [vmem:[%s152 + $0x13c] sm:%s145]
                %241 = vst [vmem:[%s153 + $0xac] sm:%s145] %v240
                %v242 = vld [vmem:[%s152 + $0x140] sm:%s145]
                %243 = vst [vmem:[%s153 + $0xb0] sm:%s145] %v242
                %v244 = vld [vmem:[%s152 + $0x144] sm:%s145]
                %245 = vst [vmem:[%s153 + $0xb4] sm:%s145] %v244
                %v246 = vld [vmem:[%s152 + $0x148] sm:%s145]
                %247 = vst [vmem:[%s153 + $0xb8] sm:%s145] %v246
                %v248 = vld [vmem:[%s152 + $0x14c] sm:%s145]
                %249 = vst [vmem:[%s153 + $0xbc] sm:%s145] %v248
                %v250 = vld [vmem:[%s152 + $0x150] sm:%s145]
                %251 = vst [vmem:[%s153 + $0xc0] sm:%s145] %v250
                %v252 = vld [vmem:[%s152 + $0x154] sm:%s145]
                %253 = vst [vmem:[%s153 + $0xc4] sm:%s145] %v252
                %v254 = vld [vmem:[%s152 + $0x158] sm:%s145]
                %255 = vst [vmem:[%s153 + $0xc8] sm:%s145] %v254
                %v256 = vld [vmem:[%s152 + $0x15c] sm:%s145]
                %257 = vst [vmem:[%s153 + $0xcc] sm:%s145] %v256
                %v258 = vld [vmem:[%s152 + $0x160] sm:%s145]
                %259 = vst [vmem:[%s153 + $0xd0] sm:%s145] %v258
                %v260 = vld [vmem:[%s152 + $0x164] sm:%s145]
                %261 = vst [vmem:[%s153 + $0xd4] sm:%s145] %v260
                %v262 = vld [vmem:[%s152 + $0x1b0] sm:%s145]
                %263 = vst [vmem:[%s153 + $0xd8] sm:%s145] %v262
                %v264 = vld [vmem:[%s152 + $0x1b4] sm:%s145]
                %265 = vst [vmem:[%s153 + $0xdc] sm:%s145] %v264
                %v266 = vld [vmem:[%s152 + $0x1b8] sm:%s145]
                %267 = vst [vmem:[%s153 + $0xe0] sm:%s145] %v266
                %v268 = vld [vmem:[%s152 + $0x1bc] sm:%s145]
                %269 = vst [vmem:[%s153 + $0xe4] sm:%s145] %v268
                %v270 = vld [vmem:[%s152 + $0x1c0] sm:%s145]
                %271 = vst [vmem:[%s153 + $0xe8] sm:%s145] %v270
                %v272 = vld [vmem:[%s152 + $0x1c4] sm:%s145]
                %273 = vst [vmem:[%s153 + $0xec] sm:%s145] %v272
                %v274 = vld [vmem:[%s152 + $0x1c8] sm:%s145]
                %275 = vst [vmem:[%s153 + $0xf0] sm:%s145] %v274
                %v276 = vld [vmem:[%s152 + $0x1cc] sm:%s145]
                %277 = vst [vmem:[%s153 + $0xf4] sm:%s145] %v276
                %v278 = vld [vmem:[%s152 + $0x1d0] sm:%s145]
                %279 = vst [vmem:[%s153 + $0xf8] sm:%s145] %v278
                %v280 = vld [vmem:[%s152 + $0x1d4] sm:%s145]
                %281 = vst [vmem:[%s153 + $0xfc] sm:%s145] %v280
                %v282 = vld [vmem:[%s152 + $0x1d8] sm:%s145]
                %283 = vst [vmem:[%s153 + $0x100] sm:%s145] %v282
                %v284 = vld [vmem:[%s152 + $0x1dc] sm:%s145]
                %285 = vst [vmem:[%s153 + $0x104] sm:%s145] %v284
                %v286 = vld [vmem:[%s152 + $0x1e0] sm:%s145]
                %287 = vst [vmem:[%s153 + $0x108] sm:%s145] %v286
                %v288 = vld [vmem:[%s152 + $0x1e4] sm:%s145]
                %289 = vst [vmem:[%s153 + $0x10c] sm:%s145] %v288
                %v290 = vld [vmem:[%s152 + $0x1e8] sm:%s145]
                %291 = vst [vmem:[%s153 + $0x110] sm:%s145] %v290
                %v292 = vld [vmem:[%s152 + $0x1ec] sm:%s145]
                %293 = vst [vmem:[%s153 + $0x114] sm:%s145] %v292
                %v294 = vld [vmem:[%s152 + $0x1f0] sm:%s145]
                %295 = vst [vmem:[%s153 + $0x118] sm:%s145] %v294
                %v296 = vld [vmem:[%s152 + $0x1f4] sm:%s145]
                %297 = vst [vmem:[%s153 + $0x11c] sm:%s145] %v296
              $region45: #{net_forward.3} parent=39 // loop_footer
                %s151 = sadd.s32 1, %s147
              $region46: #{net_forward.3} parent=39 // loop_footer_branch
                %146 = sbr.rel target = $region42
              $region47: #{net_forward.3} parent=39 // loop_exit
                _
            $region40: #{net_forward.3} parent=31 // pred_fallthru
              _
          $region32: #{net_forward.3} parent=27 // pred_fallthru
            _
          %462 = vnop
        $region28: #{net_forward.3} parent=23 // pred_fallthru
          _
      $region24: #{net_forward.3} parent=5 // pred_fallthru
        _
      %p463 = scmp.le.s32.totalorder 1, %s9
      %p464 = scmp.lt.s32.totalorder %s9, 3
      %p465 = pnand %p463, %p464
      %p466 = pneg %p465
      // Predicated region
      $region66: #{net_forward.3} parent=5 // pred_check
        _
      $region67: #{net_forward.3} parent=5 // pred_check_branch
        %468 = sbr.rel (%p465) target = $region69
      $region68: #{net_forward.3} parent=5 // pred_region
        %s469 = ssub.s32 %s9, 1
        %s470 = sand.u32 %s22, 1
        %s471 = sand.u32 %s22, 1
        %s472 = smul.addr %s471, 288
        %s473 = scalar_lea.vmem [#allocation2], %s472
        // Predicated region
        $region70: #{net_forward.3} parent=68 // pred_check
          %p474 = pneg %p35
        $region71: #{net_forward.3} parent=68 // pred_check_branch
          %476 = sbr.rel (%p474) target = $region73
        $region72: #{net_forward.3} parent=68 // pred_region
          _
        $region73: #{net_forward.3} parent=68 // pred_fallthru
          _
        %s477 = sand.u32 %s22, 1
        %s478 = sand.u32 %s22, 1
        %s479 = smul.addr %s478, 288
        %s480 = scalar_lea.vmem [#allocation2], %s479
        %p481 = pneg %p35
        %p482 = pneg %p32
        %p483 = pneg %p56
        %p484 = pneg %p53
        %p485 = pneg %p77
        %p486 = pneg %p74
        %p487 = pneg %p103
        %p488 = pneg %p100
        %s489 = smul.u32 18, %s14
        %p490 = scmp.lt.s32.totalorder %s489, 35
        %s491 = scalar_select %p490, %s489, 35
        %s492 = smul.addr %s491, 4
        %s493 = scalar_lea.vmem %s3, %s492
        %s494 = smul.u32 18, %s14
        %s495 = smul.u32 18, %s14
        %p496 = scmp.lt.s32.totalorder %s495, 35
        %s497 = scalar_select %p496, %s495, 35
        %s498 = smul.addr %s497, 4
        %s499 = scalar_lea.vmem %s3, %s498
        %s500 = smul.u32 18, %s14
        %v502 = vld [vmem:[%s473] sm:$0xf]
        %v503 = vld [vmem:[%s473 + $0x4] sm:$0xf]
        %v504 = vld [vmem:[%s473 + $0x8] sm:$0xf]
        %v505 = vld [vmem:[%s473 + $0xc] sm:$0xf]
        %v506 = vld [vmem:[%s473 + $0x10] sm:$0xf]
        %v507 = vld [vmem:[%s473 + $0x14] sm:$0xf]
        %v508 = vld [vmem:[%s473 + $0x18] sm:$0xf]
        %v509 = vld [vmem:[%s473 + $0x1c] sm:$0xf]
        %v510 = vld [vmem:[%s473 + $0x20] sm:$0xf]
        %v511 = vld [vmem:[%s473 + $0x24] sm:$0xf]
        %v512 = vld [vmem:[%s473 + $0x28] sm:$0xf]
        %v513 = vld [vmem:[%s473 + $0x2c] sm:$0xf]
        %v514 = vld [vmem:[%s473 + $0x30] sm:$0xf]
        %v515 = vld [vmem:[%s473 + $0x34] sm:$0xf]
        %v516 = vld [vmem:[%s473 + $0x38] sm:$0xf]
        %v517 = vld [vmem:[%s473 + $0x3c] sm:$0xf]
        %v518 = vld [vmem:[%s473 + $0x40] sm:$0xf]
        %v519 = vld [vmem:[%s473 + $0x44] sm:$0xf]
        %v520 = vld [vmem:[%s473 + $0x48] sm:$0xf]
        %v521 = vld [vmem:[%s473 + $0x4c] sm:$0xf]
        %v522 = vld [vmem:[%s473 + $0x50] sm:$0xf]
        %v523 = vld [vmem:[%s473 + $0x54] sm:$0xf]
        %v524 = vld [vmem:[%s473 + $0x58] sm:$0xf]
        %v525 = vld [vmem:[%s473 + $0x5c] sm:$0xf]
        %v526 = vld [vmem:[%s473 + $0x60] sm:$0xf]
        %v527 = vld [vmem:[%s473 + $0x64] sm:$0xf]
        %v528 = vld [vmem:[%s473 + $0x68] sm:$0xf]
        %v529 = vld [vmem:[%s473 + $0x6c] sm:$0xf]
        %v530 = vld [vmem:[%s473 + $0x70] sm:$0xf]
        %v531 = vld [vmem:[%s473 + $0x74] sm:$0xf]
        %v532 = vld [vmem:[%s473 + $0x78] sm:$0xf]
        %v533 = vld [vmem:[%s473 + $0x7c] sm:$0xf]
        %v534 = vld [vmem:[%s473 + $0x80] sm:$0xf]
        %v535 = vld [vmem:[%s473 + $0x84] sm:$0xf]
        %v536 = vld [vmem:[%s473 + $0x88] sm:$0xf]
        %v537 = vld [vmem:[%s473 + $0x8c] sm:$0xf]
        %v538 = vld [vmem:[%s473 + $0x90] sm:$0xf]
        %v539 = vld [vmem:[%s473 + $0x94] sm:$0xf]
        %v540 = vld [vmem:[%s473 + $0x98] sm:$0xf]
        %v541 = vld [vmem:[%s473 + $0x9c] sm:$0xf]
        %v542 = vld [vmem:[%s473 + $0xa0] sm:$0xf]
        %v543 = vld [vmem:[%s473 + $0xa4] sm:$0xf]
        %v544 = vld [vmem:[%s473 + $0xa8] sm:$0xf]
        %v545 = vld [vmem:[%s473 + $0xac] sm:$0xf]
        %v546 = vld [vmem:[%s473 + $0xb0] sm:$0xf]
        %v547 = vld [vmem:[%s473 + $0xb4] sm:$0xf]
        %v548 = vld [vmem:[%s473 + $0xb8] sm:$0xf]
        %v549 = vld [vmem:[%s473 + $0xbc] sm:$0xf]
        %v550 = vld [vmem:[%s473 + $0xc0] sm:$0xf]
        %v551 = vld [vmem:[%s473 + $0xc4] sm:$0xf]
        %v552 = vld [vmem:[%s473 + $0xc8] sm:$0xf]
        %v553 = vld [vmem:[%s473 + $0xcc] sm:$0xf]
        %v554 = vld [vmem:[%s473 + $0xd0] sm:$0xf]
        %v555 = vld [vmem:[%s473 + $0xd4] sm:$0xf]
        %v556 = vld [vmem:[%s473 + $0xd8] sm:$0xf]
        %v557 = vld [vmem:[%s473 + $0xdc] sm:$0xf]
        %v558 = vld [vmem:[%s473 + $0xe0] sm:$0xf]
        %v559 = vld [vmem:[%s473 + $0xe4] sm:$0xf]
        %v560 = vld [vmem:[%s473 + $0xe8] sm:$0xf]
        %v561 = vld [vmem:[%s473 + $0xec] sm:$0xf]
        %v562 = vld [vmem:[%s473 + $0xf0] sm:$0xf]
        %v563 = vld [vmem:[%s473 + $0xf4] sm:$0xf]
        %v564 = vld [vmem:[%s473 + $0xf8] sm:$0xf]
        %v565 = vld [vmem:[%s473 + $0xfc] sm:$0xf]
        %v566 = vld [vmem:[%s473 + $0x100] sm:$0xf]
        %v567 = vld [vmem:[%s473 + $0x104] sm:$0xf]
        %v568 = vld [vmem:[%s473 + $0x108] sm:$0xf]
        %v569 = vld [vmem:[%s473 + $0x10c] sm:$0xf]
        %v570 = vld [vmem:[%s473 + $0x110] sm:$0xf]
        %v571 = vld [vmem:[%s473 + $0x114] sm:$0xf]
        %v572 = vld [vmem:[%s473 + $0x118] sm:$0xf]
        %v573 = vld [vmem:[%s473 + $0x11c] sm:$0xf]
        %v574 = vld [vmem:[%s1] sm:$0xf]
        %v575 = vld [vmem:[%s1 + $0x4] sm:$0xf]
        %v576 = vld [vmem:[%s1 + $0x8] sm:$0xf]
        %v577 = vld [vmem:[%s1 + $0xc] sm:$0x1]
        %v650 = vunpack.c.l.b16 %v502
        %v651 = vunpack.c.l.b16 %v503
        %v652 = vunpack.c.l.b16 %v504
        %v653 = vunpack.c.l.b16 %v505
        %v654 = vunpack.c.l.b16 %v506
        %v655 = vunpack.c.l.b16 %v507
        %v656 = vunpack.c.l.b16 %v508
        %v657 = vunpack.c.l.b16 %v509
        %v658 = vunpack.c.l.b16 %v510
        %v659 = vunpack.c.l.b16 %v511
        %v660 = vunpack.c.l.b16 %v512
        %v661 = vunpack.c.l.b16 %v513
        %v662 = vunpack.c.l.b16 %v514
        %v663 = vunpack.c.l.b16 %v515
        %v664 = vunpack.c.l.b16 %v516
        %v665 = vunpack.c.l.b16 %v517
        %v666 = vunpack.c.l.b16 %v518
        %v667 = vunpack.c.l.b16 %v519
        %v668 = vunpack.c.l.b16 %v520
        %v669 = vunpack.c.l.b16 %v521
        %v670 = vunpack.c.l.b16 %v522
        %v671 = vunpack.c.l.b16 %v523
        %v672 = vunpack.c.l.b16 %v524
        %v673 = vunpack.c.l.b16 %v525
        %v674 = vunpack.c.l.b16 %v526
        %v675 = vunpack.c.l.b16 %v527
        %v676 = vunpack.c.l.b16 %v528
        %v677 = vunpack.c.l.b16 %v529
        %v678 = vunpack.c.l.b16 %v530
        %v679 = vunpack.c.l.b16 %v531
        %v680 = vunpack.c.l.b16 %v532
        %v681 = vunpack.c.l.b16 %v533
        %v682 = vunpack.c.l.b16 %v534
        %v683 = vunpack.c.l.b16 %v535
        %v684 = vunpack.c.l.b16 %v536
        %v685 = vunpack.c.l.b16 %v537
        %v686 = vunpack.c.l.b16 %v538
        %v687 = vunpack.c.l.b16 %v539
        %v688 = vunpack.c.l.b16 %v540
        %v689 = vunpack.c.l.b16 %v541
        %v690 = vunpack.c.l.b16 %v542
        %v691 = vunpack.c.l.b16 %v543
        %v692 = vunpack.c.l.b16 %v544
        %v693 = vunpack.c.l.b16 %v545
        %v694 = vunpack.c.l.b16 %v546
        %v695 = vunpack.c.l.b16 %v547
        %v696 = vunpack.c.l.b16 %v548
        %v697 = vunpack.c.l.b16 %v549
        %v698 = vunpack.c.l.b16 %v550
        %v699 = vunpack.c.l.b16 %v551
        %v700 = vunpack.c.l.b16 %v552
        %v701 = vunpack.c.l.b16 %v553
        %v702 = vunpack.c.l.b16 %v554
        %v703 = vunpack.c.l.b16 %v555
        %v704 = vunpack.c.l.b16 %v556
        %v705 = vunpack.c.l.b16 %v557
        %v706 = vunpack.c.l.b16 %v558
        %v707 = vunpack.c.l.b16 %v559
        %v708 = vunpack.c.l.b16 %v560
        %v709 = vunpack.c.l.b16 %v561
        %v710 = vunpack.c.l.b16 %v562
        %v711 = vunpack.c.l.b16 %v563
        %v712 = vunpack.c.l.b16 %v564
        %v713 = vunpack.c.l.b16 %v565
        %v714 = vunpack.c.l.b16 %v566
        %v715 = vunpack.c.l.b16 %v567
        %v716 = vunpack.c.l.b16 %v568
        %v717 = vunpack.c.l.b16 %v569
        %v718 = vunpack.c.l.b16 %v570
        %v719 = vunpack.c.l.b16 %v571
        %v720 = vunpack.c.l.b16 %v572
        %v721 = vunpack.c.l.b16 %v573
        %v722 = vpack.c.b16 %v651, %v650
        %v723 = vpack.c.b16 %v653, %v652
        %v724 = vpack.c.b16 %v655, %v654
        %v725 = vpack.c.b16 %v657, %v656
        %v726 = vpack.c.b16 %v659, %v658
        %v727 = vpack.c.b16 %v661, %v660
        %v728 = vpack.c.b16 %v663, %v662
        %v729 = vpack.c.b16 %v665, %v664
        %v730 = vpack.c.b16 %v667, %v666
        %v731 = vpack.c.b16 %v669, %v668
        %v732 = vpack.c.b16 %v671, %v670
        %v733 = vpack.c.b16 %v673, %v672
        %v734 = vpack.c.b16 %v675, %v674
        %v735 = vpack.c.b16 %v677, %v676
        %v736 = vpack.c.b16 %v679, %v678
        %v737 = vpack.c.b16 %v681, %v680
        %v738 = vpack.c.b16 %v683, %v682
        %v739 = vpack.c.b16 %v685, %v684
        %v740 = vpack.c.b16 %v687, %v686
        %v741 = vpack.c.b16 %v689, %v688
        %v742 = vpack.c.b16 %v691, %v690
        %v743 = vpack.c.b16 %v693, %v692
        %v744 = vpack.c.b16 %v695, %v694
        %v745 = vpack.c.b16 %v697, %v696
        %v746 = vpack.c.b16 %v699, %v698
        %v747 = vpack.c.b16 %v701, %v700
        %v748 = vpack.c.b16 %v703, %v702
        %v749 = vpack.c.b16 %v705, %v704
        %v750 = vpack.c.b16 %v707, %v706
        %v751 = vpack.c.b16 %v709, %v708
        %v752 = vpack.c.b16 %v711, %v710
        %v753 = vpack.c.b16 %v713, %v712
        %v754 = vpack.c.b16 %v715, %v714
        %v755 = vpack.c.b16 %v717, %v716
        %v756 = vpack.c.b16 %v719, %v718
        %v757 = vpack.c.b16 %v721, %v720
        %v762 = vunpack.c.l.b16 %v574
        %v763 = vunpack.c.l.b16 %v575
        %v764 = vunpack.c.l.b16 %v576
        %v765 = vunpack.c.l.b16 %v577
        %v766 = vpack.c.b16 %v763, %v762
        %v767 = vpack.c.b16 %v765, %v764
        %vm769 = vcmask 203776
        %v771 = vsel %vm769, %v722, 0
        %v774 = vsel %vm769, %v723, 0
        %v777 = vsel %vm769, %v724, 0
        %v780 = vsel %vm769, %v725, 0
        %v783 = vsel %vm769, %v726, 0
        %v786 = vsel %vm769, %v727, 0
        %v789 = vsel %vm769, %v728, 0
        %v792 = vsel %vm769, %v729, 0
        %v795 = vsel %vm769, %v730, 0
        %v798 = vsel %vm769, %v731, 0
        %v801 = vsel %vm769, %v732, 0
        %v804 = vsel %vm769, %v733, 0
        %v807 = vsel %vm769, %v734, 0
        %v810 = vsel %vm769, %v735, 0
        %v813 = vsel %vm769, %v736, 0
        %v816 = vsel %vm769, %v737, 0
        %v819 = vsel %vm769, %v738, 0
        %v822 = vsel %vm769, %v739, 0
        %v825 = vsel %vm769, %v740, 0
        %v828 = vsel %vm769, %v741, 0
        %v831 = vsel %vm769, %v742, 0
        %v834 = vsel %vm769, %v743, 0
        %v837 = vsel %vm769, %v744, 0
        %v840 = vsel %vm769, %v745, 0
        %v843 = vsel %vm769, %v746, 0
        %v846 = vsel %vm769, %v747, 0
        %v849 = vsel %vm769, %v748, 0
        %v852 = vsel %vm769, %v749, 0
        %v855 = vsel %vm769, %v750, 0
        %v858 = vsel %vm769, %v751, 0
        %v861 = vsel %vm769, %v752, 0
        %v864 = vsel %vm769, %v753, 0
        %v867 = vsel %vm769, %v754, 0
        %v870 = vsel %vm769, %v755, 0
        %v873 = vsel %vm769, %v756, 0
        %v876 = vsel %vm769, %v757, 0
        %vm878 = vcmask 1043456
        %vm879 = vcmask 1044480
        %v880 = vsel %vm878, 4294967295, 65535
        %v881 = vsel %vm879, %v880, 0
        %v883 = vand.u32 %v767, %v881
        %885 = vmatpush.bf16.msra.mxu0 0
        %886 = vmatpush.bf16.msra.mxu0 0
        %887 = vmatpush.bf16.msra.mxu0 0
        %888 = vmatpush.bf16.msra.mxu0 0
        %889 = vmatpush.bf16.msra.mxu0 0
        %890 = vmatpush.bf16.msra.mxu0 0
        %891 = vmatpush.bf16.msra.mxu0 %v883
        %892 = vmatpush.bf16.msra.mxu0 %v766
        %893 = vmatmul.bf16.gmra.mxu0 %v771
        %v894 = vpop.f32.mrf.mxu0
        %v895 = vadd.f32 0.0, %v894
        %v896 = vpop.f32.mrf.mxu0
        %v897 = vadd.f32 0.0, %v896
        %898 = vmatmul.bf16.gmra.mxu0 %v774
        %v899 = vpop.f32.mrf.mxu0
        %v900 = vadd.f32 0.0, %v899
        %v901 = vpop.f32.mrf.mxu0
        %v902 = vadd.f32 0.0, %v901
        %903 = vmatmul.bf16.gmra.mxu0 %v777
        %v904 = vpop.f32.mrf.mxu0
        %v905 = vadd.f32 0.0, %v904
        %v906 = vpop.f32.mrf.mxu0
        %v907 = vadd.f32 0.0, %v906
        %908 = vmatmul.bf16.gmra.mxu0 %v780
        %v909 = vpop.f32.mrf.mxu0
        %v910 = vadd.f32 0.0, %v909
        %v911 = vpop.f32.mrf.mxu0
        %v912 = vadd.f32 0.0, %v911
        %913 = vmatmul.bf16.gmra.mxu0 %v783
        %v914 = vpop.f32.mrf.mxu0
        %v915 = vadd.f32 0.0, %v914
        %v916 = vpop.f32.mrf.mxu0
        %v917 = vadd.f32 0.0, %v916
        %918 = vmatmul.bf16.gmra.mxu0 %v786
        %v919 = vpop.f32.mrf.mxu0
        %v920 = vadd.f32 0.0, %v919
        %v921 = vpop.f32.mrf.mxu0
        %v922 = vadd.f32 0.0, %v921
        %923 = vmatmul.bf16.gmra.mxu0 %v789
        %v924 = vpop.f32.mrf.mxu0
        %v925 = vadd.f32 0.0, %v924
        %v926 = vpop.f32.mrf.mxu0
        %v927 = vadd.f32 0.0, %v926
        %928 = vmatmul.bf16.gmra.mxu0 %v792
        %v929 = vpop.f32.mrf.mxu0
        %v930 = vadd.f32 0.0, %v929
        %v931 = vpop.f32.mrf.mxu0
        %v932 = vadd.f32 0.0, %v931
        %933 = vmatmul.bf16.gmra.mxu0 %v795
        %v934 = vpop.f32.mrf.mxu0
        %v935 = vadd.f32 0.0, %v934
        %v936 = vpop.f32.mrf.mxu0
        %v937 = vadd.f32 0.0, %v936
        %938 = vmatmul.bf16.gmra.mxu0 %v798
        %v939 = vpop.f32.mrf.mxu0
        %v940 = vadd.f32 0.0, %v939
        %v941 = vpop.f32.mrf.mxu0
        %v942 = vadd.f32 0.0, %v941
        %943 = vmatmul.bf16.gmra.mxu0 %v801
        %v944 = vpop.f32.mrf.mxu0
        %v945 = vadd.f32 0.0, %v944
        %v946 = vpop.f32.mrf.mxu0
        %v947 = vadd.f32 0.0, %v946
        %948 = vmatmul.bf16.gmra.mxu0 %v804
        %v949 = vpop.f32.mrf.mxu0
        %v950 = vadd.f32 0.0, %v949
        %v951 = vpop.f32.mrf.mxu0
        %v952 = vadd.f32 0.0, %v951
        %953 = vmatmul.bf16.gmra.mxu0 %v807
        %v954 = vpop.f32.mrf.mxu0
        %v955 = vadd.f32 0.0, %v954
        %v956 = vpop.f32.mrf.mxu0
        %v957 = vadd.f32 0.0, %v956
        %958 = vmatmul.bf16.gmra.mxu0 %v810
        %v959 = vpop.f32.mrf.mxu0
        %v960 = vadd.f32 0.0, %v959
        %v961 = vpop.f32.mrf.mxu0
        %v962 = vadd.f32 0.0, %v961
        %963 = vmatmul.bf16.gmra.mxu0 %v813
        %v964 = vpop.f32.mrf.mxu0
        %v965 = vadd.f32 0.0, %v964
        %v966 = vpop.f32.mrf.mxu0
        %v967 = vadd.f32 0.0, %v966
        %968 = vmatmul.bf16.gmra.mxu0 %v816
        %v969 = vpop.f32.mrf.mxu0
        %v970 = vadd.f32 0.0, %v969
        %v971 = vpop.f32.mrf.mxu0
        %v972 = vadd.f32 0.0, %v971
        %973 = vmatmul.bf16.gmra.mxu0 %v819
        %v974 = vpop.f32.mrf.mxu0
        %v975 = vadd.f32 0.0, %v974
        %v976 = vpop.f32.mrf.mxu0
        %v977 = vadd.f32 0.0, %v976
        %978 = vmatmul.bf16.gmra.mxu0 %v822
        %v979 = vpop.f32.mrf.mxu0
        %v980 = vadd.f32 0.0, %v979
        %v981 = vpop.f32.mrf.mxu0
        %v982 = vadd.f32 0.0, %v981
        %983 = vmatmul.bf16.gmra.mxu0 %v825
        %v984 = vpop.f32.mrf.mxu0
        %v985 = vadd.f32 0.0, %v984
        %v986 = vpop.f32.mrf.mxu0
        %v987 = vadd.f32 0.0, %v986
        %988 = vmatmul.bf16.gmra.mxu0 %v828
        %v989 = vpop.f32.mrf.mxu0
        %v990 = vadd.f32 0.0, %v989
        %v991 = vpop.f32.mrf.mxu0
        %v992 = vadd.f32 0.0, %v991
        %993 = vmatmul.bf16.gmra.mxu0 %v831
        %v994 = vpop.f32.mrf.mxu0
        %v995 = vadd.f32 0.0, %v994
        %v996 = vpop.f32.mrf.mxu0
        %v997 = vadd.f32 0.0, %v996
        %998 = vmatmul.bf16.gmra.mxu0 %v834
        %v999 = vpop.f32.mrf.mxu0
        %v1000 = vadd.f32 0.0, %v999
        %v1001 = vpop.f32.mrf.mxu0
        %v1002 = vadd.f32 0.0, %v1001
        %1003 = vmatmul.bf16.gmra.mxu0 %v837
        %v1004 = vpop.f32.mrf.mxu0
        %v1005 = vadd.f32 0.0, %v1004
        %v1006 = vpop.f32.mrf.mxu0
        %v1007 = vadd.f32 0.0, %v1006
        %1008 = vmatmul.bf16.gmra.mxu0 %v840
        %v1009 = vpop.f32.mrf.mxu0
        %v1010 = vadd.f32 0.0, %v1009
        %v1011 = vpop.f32.mrf.mxu0
        %v1012 = vadd.f32 0.0, %v1011
        %1013 = vmatmul.bf16.gmra.mxu0 %v843
        %v1014 = vpop.f32.mrf.mxu0
        %v1015 = vadd.f32 0.0, %v1014
        %v1016 = vpop.f32.mrf.mxu0
        %v1017 = vadd.f32 0.0, %v1016
        %1018 = vmatmul.bf16.gmra.mxu0 %v846
        %v1019 = vpop.f32.mrf.mxu0
        %v1020 = vadd.f32 0.0, %v1019
        %v1021 = vpop.f32.mrf.mxu0
        %v1022 = vadd.f32 0.0, %v1021
        %1023 = vmatmul.bf16.gmra.mxu0 %v849
        %v1024 = vpop.f32.mrf.mxu0
        %v1025 = vadd.f32 0.0, %v1024
        %v1026 = vpop.f32.mrf.mxu0
        %v1027 = vadd.f32 0.0, %v1026
        %1028 = vmatmul.bf16.gmra.mxu0 %v852
        %v1029 = vpop.f32.mrf.mxu0
        %v1030 = vadd.f32 0.0, %v1029
        %v1031 = vpop.f32.mrf.mxu0
        %v1032 = vadd.f32 0.0, %v1031
        %1033 = vmatmul.bf16.gmra.mxu0 %v855
        %v1034 = vpop.f32.mrf.mxu0
        %v1035 = vadd.f32 0.0, %v1034
        %v1036 = vpop.f32.mrf.mxu0
        %v1037 = vadd.f32 0.0, %v1036
        %1038 = vmatmul.bf16.gmra.mxu0 %v858
        %v1039 = vpop.f32.mrf.mxu0
        %v1040 = vadd.f32 0.0, %v1039
        %v1041 = vpop.f32.mrf.mxu0
        %v1042 = vadd.f32 0.0, %v1041
        %1043 = vmatmul.bf16.gmra.mxu0 %v861
        %v1044 = vpop.f32.mrf.mxu0
        %v1045 = vadd.f32 0.0, %v1044
        %v1046 = vpop.f32.mrf.mxu0
        %v1047 = vadd.f32 0.0, %v1046
        %1048 = vmatmul.bf16.gmra.mxu0 %v864
        %v1049 = vpop.f32.mrf.mxu0
        %v1050 = vadd.f32 0.0, %v1049
        %v1051 = vpop.f32.mrf.mxu0
        %v1052 = vadd.f32 0.0, %v1051
        %1053 = vmatmul.bf16.gmra.mxu0 %v867
        %v1054 = vpop.f32.mrf.mxu0
        %v1055 = vadd.f32 0.0, %v1054
        %v1056 = vpop.f32.mrf.mxu0
        %v1057 = vadd.f32 0.0, %v1056
        %1058 = vmatmul.bf16.gmra.mxu0 %v870
        %v1059 = vpop.f32.mrf.mxu0
        %v1060 = vadd.f32 0.0, %v1059
        %v1061 = vpop.f32.mrf.mxu0
        %v1062 = vadd.f32 0.0, %v1061
        %1063 = vmatmul.bf16.gmra.mxu0 %v873
        %v1064 = vpop.f32.mrf.mxu0
        %v1065 = vadd.f32 0.0, %v1064
        %v1066 = vpop.f32.mrf.mxu0
        %v1067 = vadd.f32 0.0, %v1066
        %1068 = vmatmul.bf16.gmra.mxu0 %v876
        %v1069 = vpop.f32.mrf.mxu0
        %v1070 = vadd.f32 0.0, %v1069
        %v1071 = vpop.f32.mrf.mxu0
        %v1072 = vadd.f32 0.0, %v1071
        %1073 = vdwg.mxu0
        %v1074 = vmax.f32 %v895, %v940
        %v1075 = vmax.f32 %v1074, %v985
        %v1076 = vmax.f32 %v1075, %v1030
        %v1077 = vmax.f32 %v897, %v942
        %v1078 = vmax.f32 %v1077, %v987
        %v1079 = vmax.f32 %v1078, %v1032
        %v1080 = vmax.f32 %v900, %v945
        %v1081 = vmax.f32 %v1080, %v990
        %v1082 = vmax.f32 %v1081, %v1035
        %v1083 = vmax.f32 %v902, %v947
        %v1084 = vmax.f32 %v1083, %v992
        %v1085 = vmax.f32 %v1084, %v1037
        %v1086 = vmax.f32 %v905, %v950
        %v1087 = vmax.f32 %v1086, %v995
        %v1088 = vmax.f32 %v1087, %v1040
        %v1089 = vmax.f32 %v907, %v952
        %v1090 = vmax.f32 %v1089, %v997
        %v1091 = vmax.f32 %v1090, %v1042
        %v1092 = vmax.f32 %v910, %v955
        %v1093 = vmax.f32 %v1092, %v1000
        %v1094 = vmax.f32 %v1093, %v1045
        %v1095 = vmax.f32 %v912, %v957
        %v1096 = vmax.f32 %v1095, %v1002
        %v1097 = vmax.f32 %v1096, %v1047
        %v1098 = vmax.f32 %v915, %v960
        %v1099 = vmax.f32 %v1098, %v1005
        %v1100 = vmax.f32 %v1099, %v1050
        %v1101 = vmax.f32 %v917, %v962
        %v1102 = vmax.f32 %v1101, %v1007
        %v1103 = vmax.f32 %v1102, %v1052
        %v1104 = vmax.f32 %v920, %v965
        %v1105 = vmax.f32 %v1104, %v1010
        %v1106 = vmax.f32 %v1105, %v1055
        %v1107 = vmax.f32 %v922, %v967
        %v1108 = vmax.f32 %v1107, %v1012
        %v1109 = vmax.f32 %v1108, %v1057
        %v1110 = vmax.f32 %v925, %v970
        %v1111 = vmax.f32 %v1110, %v1015
        %v1112 = vmax.f32 %v1111, %v1060
        %v1113 = vmax.f32 %v927, %v972
        %v1114 = vmax.f32 %v1113, %v1017
        %v1115 = vmax.f32 %v1114, %v1062
        %v1116 = vmax.f32 %v930, %v975
        %v1117 = vmax.f32 %v1116, %v1020
        %v1118 = vmax.f32 %v1117, %v1065
        %v1119 = vmax.f32 %v932, %v977
        %v1120 = vmax.f32 %v1119, %v1022
        %v1121 = vmax.f32 %v1120, %v1067
        %v1122 = vmax.f32 %v935, %v980
        %v1123 = vmax.f32 %v1122, %v1025
        %v1124 = vmax.f32 %v1123, %v1070
        %v1125 = vmax.f32 %v937, %v982
        %v1126 = vmax.f32 %v1125, %v1027
        %v1127 = vmax.f32 %v1126, %v1072
        %v1128 = vld [vmem:[%s2] sm:$0x1]
        %v1130 = vperm.slane %v1128, 0
        %v1132 = vadd.f32 %v1076, %v1130
        %v1133 = vadd.f32 %v1079, %v1130
        %v1134 = vadd.f32 %v1082, %v1130
        %v1135 = vadd.f32 %v1085, %v1130
        %v1136 = vadd.f32 %v1088, %v1130
        %v1137 = vadd.f32 %v1091, %v1130
        %v1138 = vadd.f32 %v1094, %v1130
        %v1139 = vadd.f32 %v1097, %v1130
        %v1140 = vadd.f32 %v1100, %v1130
        %v1141 = vadd.f32 %v1103, %v1130
        %v1142 = vadd.f32 %v1106, %v1130
        %v1143 = vadd.f32 %v1109, %v1130
        %v1144 = vadd.f32 %v1112, %v1130
        %v1145 = vadd.f32 %v1115, %v1130
        %v1146 = vadd.f32 %v1118, %v1130
        %v1147 = vadd.f32 %v1121, %v1130
        %v1148 = vadd.f32 %v1124, %v1130
        %v1149 = vadd.f32 %v1127, %v1130
        %v1150 = vmax.f32 %v1132, 0.0
        %v1151 = vmax.f32 %v1133, 0.0
        %v1152 = vmax.f32 %v1134, 0.0
        %v1153 = vmax.f32 %v1135, 0.0
        %v1154 = vmax.f32 %v1136, 0.0
        %v1155 = vmax.f32 %v1137, 0.0
        %v1156 = vmax.f32 %v1138, 0.0
        %v1157 = vmax.f32 %v1139, 0.0
        %v1158 = vmax.f32 %v1140, 0.0
        %v1159 = vmax.f32 %v1141, 0.0
        %v1160 = vmax.f32 %v1142, 0.0
        %v1161 = vmax.f32 %v1143, 0.0
        %v1162 = vmax.f32 %v1144, 0.0
        %v1163 = vmax.f32 %v1145, 0.0
        %v1164 = vmax.f32 %v1146, 0.0
        %v1165 = vmax.f32 %v1147, 0.0
        %v1166 = vmax.f32 %v1148, 0.0
        %v1167 = vmax.f32 %v1149, 0.0
        %v1168 = vpack.c.bf16 %v1150, %v1150
        %v1169 = vpack.c.bf16 %v1151, %v1151
        %v1170 = vpack.c.bf16 %v1152, %v1152
        %v1171 = vpack.c.bf16 %v1153, %v1153
        %v1172 = vpack.c.bf16 %v1154, %v1154
        %v1173 = vpack.c.bf16 %v1155, %v1155
        %v1174 = vpack.c.bf16 %v1156, %v1156
        %v1175 = vpack.c.bf16 %v1157, %v1157
        %v1176 = vpack.c.bf16 %v1158, %v1158
        %v1177 = vpack.c.bf16 %v1159, %v1159
        %v1178 = vpack.c.bf16 %v1160, %v1160
        %v1179 = vpack.c.bf16 %v1161, %v1161
        %v1180 = vpack.c.bf16 %v1162, %v1162
        %v1181 = vpack.c.bf16 %v1163, %v1163
        %v1182 = vpack.c.bf16 %v1164, %v1164
        %v1183 = vpack.c.bf16 %v1165, %v1165
        %v1184 = vpack.c.bf16 %v1166, %v1166
        %v1185 = vpack.c.bf16 %v1167, %v1167
        %1186 = vst [vmem:[%s499] sm:$0xf] %v1168
        %1187 = vst [vmem:[%s499 + $0x4] sm:$0xf] %v1169
        %1188 = vst [vmem:[%s499 + $0x8] sm:$0xf] %v1170
        %1189 = vst [vmem:[%s499 + $0xc] sm:$0xf] %v1171
        %1190 = vst [vmem:[%s499 + $0x10] sm:$0xf] %v1172
        %1191 = vst [vmem:[%s499 + $0x14] sm:$0xf] %v1173
        %1192 = vst [vmem:[%s499 + $0x18] sm:$0xf] %v1174
        %1193 = vst [vmem:[%s499 + $0x1c] sm:$0xf] %v1175
        %1194 = vst [vmem:[%s499 + $0x20] sm:$0xf] %v1176
        %1195 = vst [vmem:[%s499 + $0x24] sm:$0xf] %v1177
        %1196 = vst [vmem:[%s499 + $0x28] sm:$0xf] %v1178
        %1197 = vst [vmem:[%s499 + $0x2c] sm:$0xf] %v1179
        %1198 = vst [vmem:[%s499 + $0x30] sm:$0xf] %v1180
        %1199 = vst [vmem:[%s499 + $0x34] sm:$0xf] %v1181
        %1200 = vst [vmem:[%s499 + $0x38] sm:$0xf] %v1182
        %1201 = vst [vmem:[%s499 + $0x3c] sm:$0xf] %v1183
        %1202 = vst [vmem:[%s499 + $0x40] sm:$0xf] %v1184
        %1203 = vst [vmem:[%s499 + $0x44] sm:$0xf] %v1185
        %s1204 = smul.u32 18, %s14
        %p1205 = scmp.lt.s32.totalorder %s1204, 35
        %s1206 = scalar_select %p1205, %s1204, 35
        %s1207 = smul.addr %s1206, 4
        %s1208 = scalar_lea.vmem %s3, %s1207
        // Predicated region
        $region74: #{net_forward.3} parent=68 // pred_check
          %p1209 = pneg %p100
        $region75: #{net_forward.3} parent=68 // pred_check_branch
          %1211 = sbr.rel (%p1209) target = $region77
        $region76: #{net_forward.3} parent=68 // pred_region
          %s1212 = smul.u32 18, %s14
        $region77: #{net_forward.3} parent=68 // pred_fallthru
          _
      $region69: #{net_forward.3} parent=5 // pred_fallthru
        _
      %p1213 = scmp.le.s32.totalorder 2, %s9
      // Predicated region
      $region78: #{net_forward.3} parent=5 // pred_check
        %p1214 = pneg %p1213
      $region79: #{net_forward.3} parent=5 // pred_check_branch
        %1216 = sbr.rel (%p1214) target = $region81
      $region80: #{net_forward.3} parent=5 // pred_region
        %s1217 = ssub.s32 %s9, 2
        // Predicated region
        $region82: #{net_forward.3} parent=80 // pred_check
          %p1218 = pneg %p106
        $region83: #{net_forward.3} parent=80 // pred_check_branch
          %1220 = sbr.rel (%p1218) target = $region85
        $region84: #{net_forward.3} parent=80 // pred_region
          %s1221 = smul.u32 18, %s15
          %p1222 = scmp.lt.s32.totalorder %s1221, 35
          %s1223 = scalar_select %p1222, %s1221, 35
          %s1224 = smul.addr %s1223, 4
          %s1225 = scalar_lea.vmem %s3, %s1224
        $region85: #{net_forward.3} parent=80 // pred_fallthru
          _
      $region81: #{net_forward.3} parent=5 // pred_fallthru
        _
    $region6: #{net_forward.3} parent=1 // loop_footer
      %s13 = sadd.s32 1, %s9
    $region7: #{net_forward.3} parent=1 // loop_footer_branch
      %8 = sbr.rel target = $region3
    $region8: #{net_forward.3} parent=1 // loop_exit
      _

// kernel: net_forward.4
$region0: #{net_forward.4}
  #allocation0 [shape = 'u32[]', space=smem, size = 0x4, offset = 0x4, fixed_abs, tag = 'smem constant byte address 0x4 - core index']
  #allocation1 [shape = 'u32[72,128]{1,0:T(1,128)}', space=vmem, size = 0x9000, scoped, tag = 'internal scratch']
  %s0 = inlined_call_operand.vmem [shape: bf16[4,32,250], index: 0, kind: input, shape index: {}]
  %s1 = inlined_call_operand.vmem [shape: bf16[250,128], index: 1, kind: input, shape index: {}]
  %s2 = inlined_call_operand.vmem [shape: f32[1,128], index: 2, kind: input, shape index: {}]
  %s3 = inlined_call_operand.vmem [shape: bf16[32,128], index: 3, kind: output, shape index: {}]
  %s4 = sld [smem:[#allocation0]]
  $region22: #{net_forward.4} parent=0
    _
  %s6 = ssub.s32 1, %s4
  %s7 = scalar_select 0, %s6, %s4
  // Predicated region
  $region2: #{net_forward.4} parent=0 // pred_check
    _
  $region3: #{net_forward.4} parent=0 // pred_check_branch
    %9 = sbr.rel (0) target = $region5
  $region4: #{net_forward.4} parent=0 // pred_region
    _
  $region5: #{net_forward.4} parent=0 // pred_fallthru
    _
  // Predicated region
  $region6: #{net_forward.4} parent=0 // pred_check
    _
  $region7: #{net_forward.4} parent=0 // pred_check_branch
    %11 = sbr.rel (0) target = $region9
  $region8: #{net_forward.4} parent=0 // pred_region
    _
  $region9: #{net_forward.4} parent=0 // pred_fallthru
    _
  // Predicated region
  $region10: #{net_forward.4} parent=0 // pred_check
    _
  $region11: #{net_forward.4} parent=0 // pred_check_branch
    %13 = sbr.rel (0) target = $region13
  $region12: #{net_forward.4} parent=0 // pred_region
    _
  $region13: #{net_forward.4} parent=0 // pred_fallthru
    _
  %v14 = vld [vmem:[%s0] sm:$0xff]
  %v15 = vld [vmem:[%s0 + $0x8] sm:$0xff]
  %v16 = vld [vmem:[%s0 + $0x10] sm:$0xff]
  %v17 = vld [vmem:[%s0 + $0x18] sm:$0xff]
  %v18 = vld [vmem:[%s0 + $0x20] sm:$0xff]
  %v19 = vld [vmem:[%s0 + $0x28] sm:$0xff]
  %v20 = vld [vmem:[%s0 + $0x30] sm:$0xff]
  %v21 = vld [vmem:[%s0 + $0x38] sm:$0xff]
  %v22 = vld [vmem:[%s0 + $0x40] sm:$0xff]
  %v23 = vld [vmem:[%s0 + $0x48] sm:$0xff]
  %v24 = vld [vmem:[%s0 + $0x50] sm:$0xff]
  %v25 = vld [vmem:[%s0 + $0x58] sm:$0xff]
  %v26 = vld [vmem:[%s0 + $0x60] sm:$0xff]
  %v27 = vld [vmem:[%s0 + $0x68] sm:$0xff]
  %v28 = vld [vmem:[%s0 + $0x70] sm:$0xff]
  %v29 = vld [vmem:[%s0 + $0x78] sm:$0xff]
  %v30 = vld [vmem:[%s1] sm:$0xf]
  %v31 = vld [vmem:[%s1 + $0x4] sm:$0xf]
  %v32 = vld [vmem:[%s1 + $0x8] sm:$0xf]
  %v33 = vld [vmem:[%s1 + $0xc] sm:$0xf]
  %v34 = vld [vmem:[%s1 + $0x10] sm:$0xf]
  %v35 = vld [vmem:[%s1 + $0x14] sm:$0xf]
  %v36 = vld [vmem:[%s1 + $0x18] sm:$0xf]
  %v37 = vld [vmem:[%s1 + $0x1c] sm:$0xf]
  %v38 = vld [vmem:[%s1 + $0x20] sm:$0xf]
  %v39 = vld [vmem:[%s1 + $0x24] sm:$0xf]
  %v40 = vld [vmem:[%s1 + $0x28] sm:$0xf]
  %v41 = vld [vmem:[%s1 + $0x2c] sm:$0xf]
  %v42 = vld [vmem:[%s1 + $0x30] sm:$0xf]
  %v43 = vld [vmem:[%s1 + $0x34] sm:$0xf]
  %v44 = vld [vmem:[%s1 + $0x38] sm:$0xf]
  %v45 = vld [vmem:[%s1 + $0x3c] sm:$0xf]
  %v46 = vld [vmem:[%s1 + $0x40] sm:$0xf]
  %v47 = vld [vmem:[%s1 + $0x44] sm:$0xf]
  %v48 = vld [vmem:[%s1 + $0x48] sm:$0xf]
  %v49 = vld [vmem:[%s1 + $0x4c] sm:$0xf]
  %v50 = vld [vmem:[%s1 + $0x50] sm:$0xf]
  %v51 = vld [vmem:[%s1 + $0x54] sm:$0xf]
  %v52 = vld [vmem:[%s1 + $0x58] sm:$0xf]
  %v53 = vld [vmem:[%s1 + $0x5c] sm:$0xf]
  %v54 = vld [vmem:[%s1 + $0x60] sm:$0xf]
  %v55 = vld [vmem:[%s1 + $0x64] sm:$0xf]
  %v56 = vld [vmem:[%s1 + $0x68] sm:$0xf]
  %v57 = vld [vmem:[%s1 + $0x6c] sm:$0xf]
  %v58 = vld [vmem:[%s1 + $0x70] sm:$0xf]
  %v59 = vld [vmem:[%s1 + $0x74] sm:$0xf]
  %v60 = vld [vmem:[%s1 + $0x78] sm:$0xf]
  %v61 = vld [vmem:[%s1 + $0x7c] sm:$0x1]
  %v78 = vunpack.c.l.b16 %v14
  %v79 = vunpack.c.h.b16 %v14
  %v80 = vunpack.c.l.b16 %v15
  %v81 = vunpack.c.h.b16 %v15
  %v82 = vunpack.c.l.b16 %v16
  %v83 = vunpack.c.h.b16 %v16
  %v84 = vunpack.c.l.b16 %v17
  %v85 = vunpack.c.h.b16 %v17
  %v86 = vunpack.c.l.b16 %v18
  %v87 = vunpack.c.h.b16 %v18
  %v88 = vunpack.c.l.b16 %v19
  %v89 = vunpack.c.h.b16 %v19
  %v90 = vunpack.c.l.b16 %v20
  %v91 = vunpack.c.h.b16 %v20
  %v92 = vunpack.c.l.b16 %v21
  %v93 = vunpack.c.h.b16 %v21
  %v94 = vunpack.c.l.b16 %v22
  %v95 = vunpack.c.h.b16 %v22
  %v96 = vunpack.c.l.b16 %v23
  %v97 = vunpack.c.h.b16 %v23
  %v98 = vunpack.c.l.b16 %v24
  %v99 = vunpack.c.h.b16 %v24
  %v100 = vunpack.c.l.b16 %v25
  %v101 = vunpack.c.h.b16 %v25
  %v102 = vunpack.c.l.b16 %v26
  %v103 = vunpack.c.h.b16 %v26
  %v104 = vunpack.c.l.b16 %v27
  %v105 = vunpack.c.h.b16 %v27
  %v106 = vunpack.c.l.b16 %v28
  %v107 = vunpack.c.h.b16 %v28
  %v108 = vunpack.c.l.b16 %v29
  %v109 = vunpack.c.h.b16 %v29
  %v110 = vpack.c.b16 %v80, %v78
  %v111 = vpack.c.b16 %v81, %v79
  %v112 = vpack.c.b16 %v84, %v82
  %v113 = vpack.c.b16 %v85, %v83
  %v114 = vpack.c.b16 %v88, %v86
  %v115 = vpack.c.b16 %v89, %v87
  %v116 = vpack.c.b16 %v92, %v90
  %v117 = vpack.c.b16 %v93, %v91
  %v118 = vpack.c.b16 %v96, %v94
  %v119 = vpack.c.b16 %v97, %v95
  %v120 = vpack.c.b16 %v100, %v98
  %v121 = vpack.c.b16 %v101, %v99
  %v122 = vpack.c.b16 %v104, %v102
  %v123 = vpack.c.b16 %v105, %v103
  %v124 = vpack.c.b16 %v108, %v106
  %v125 = vpack.c.b16 %v109, %v107
  %v166 = vunpack.c.l.b16 %v30
  %v167 = vunpack.c.l.b16 %v31
  %v168 = vunpack.c.l.b16 %v32
  %v169 = vunpack.c.l.b16 %v33
  %v170 = vunpack.c.l.b16 %v34
  %v171 = vunpack.c.l.b16 %v35
  %v172 = vunpack.c.l.b16 %v36
  %v173 = vunpack.c.l.b16 %v37
  %v174 = vunpack.c.l.b16 %v38
  %v175 = vunpack.c.l.b16 %v39
  %v176 = vunpack.c.l.b16 %v40
  %v177 = vunpack.c.l.b16 %v41
  %v178 = vunpack.c.l.b16 %v42
  %v179 = vunpack.c.l.b16 %v43
  %v180 = vunpack.c.l.b16 %v44
  %v181 = vunpack.c.l.b16 %v45
  %v182 = vunpack.c.l.b16 %v46
  %v183 = vunpack.c.l.b16 %v47
  %v184 = vunpack.c.l.b16 %v48
  %v185 = vunpack.c.l.b16 %v49
  %v186 = vunpack.c.l.b16 %v50
  %v187 = vunpack.c.l.b16 %v51
  %v188 = vunpack.c.l.b16 %v52
  %v189 = vunpack.c.l.b16 %v53
  %v190 = vunpack.c.l.b16 %v54
  %v191 = vunpack.c.l.b16 %v55
  %v192 = vunpack.c.l.b16 %v56
  %v193 = vunpack.c.l.b16 %v57
  %v194 = vunpack.c.l.b16 %v58
  %v195 = vunpack.c.l.b16 %v59
  %v196 = vunpack.c.l.b16 %v60
  %v197 = vunpack.c.l.b16 %v61
  %v198 = vpack.c.b16 %v167, %v166
  %v199 = vpack.c.b16 %v169, %v168
  %v200 = vpack.c.b16 %v171, %v170
  %v201 = vpack.c.b16 %v173, %v172
  %v202 = vpack.c.b16 %v175, %v174
  %v203 = vpack.c.b16 %v177, %v176
  %v204 = vpack.c.b16 %v179, %v178
  %v205 = vpack.c.b16 %v181, %v180
  %v206 = vpack.c.b16 %v183, %v182
  %v207 = vpack.c.b16 %v185, %v184
  %v208 = vpack.c.b16 %v187, %v186
  %v209 = vpack.c.b16 %v189, %v188
  %v210 = vpack.c.b16 %v191, %v190
  %v211 = vpack.c.b16 %v193, %v192
  %v212 = vpack.c.b16 %v195, %v194
  %v213 = vpack.c.b16 %v197, %v196
  %vm229 = vcmask 998400
  %v231 = vsel %vm229, %v111, 0
  %v234 = vsel %vm229, %v113, 0
  %v237 = vsel %vm229, %v115, 0
  %v240 = vsel %vm229, %v117, 0
  %v243 = vsel %vm229, %v119, 0
  %v246 = vsel %vm229, %v121, 0
  %v249 = vsel %vm229, %v123, 0
  %v252 = vsel %vm229, %v125, 0
  %vm254 = vcmask 1044480
  %v256 = vsel %vm254, %v213, 0
  %258 = vmatpush.bf16.msra.mxu0 %v205
  %259 = vmatpush.bf16.msra.mxu0 %v204
  %260 = vmatpush.bf16.msra.mxu0 %v203
  %261 = vmatpush.bf16.msra.mxu0 %v202
  %262 = vmatpush.bf16.msra.mxu0 %v201
  %263 = vmatpush.bf16.msra.mxu0 %v200
  %264 = vmatpush.bf16.msra.mxu0 %v199
  %265 = vmatpush.bf16.msra.mxu0 %v198
  %266 = vmatmul.bf16.gmra.mxu0 %v110
  %v267 = vpop.f32.mrf.mxu0
  %v268 = vadd.f32 0.0, %v267
  %v269 = vpop.f32.mrf.mxu0
  %v270 = vadd.f32 0.0, %v269
  %271 = vmatmul.bf16.gmra.mxu0 %v112
  %v272 = vpop.f32.mrf.mxu0
  %v273 = vadd.f32 0.0, %v272
  %v274 = vpop.f32.mrf.mxu0
  %v275 = vadd.f32 0.0, %v274
  %276 = vmatmul.bf16.gmra.mxu0 %v114
  %v277 = vpop.f32.mrf.mxu0
  %v278 = vadd.f32 0.0, %v277
  %v279 = vpop.f32.mrf.mxu0
  %v280 = vadd.f32 0.0, %v279
  %281 = vmatmul.bf16.gmra.mxu0 %v116
  %v282 = vpop.f32.mrf.mxu0
  %v283 = vadd.f32 0.0, %v282
  %v284 = vpop.f32.mrf.mxu0
  %v285 = vadd.f32 0.0, %v284
  %286 = vmatmul.bf16.gmra.mxu0 %v118
  %v287 = vpop.f32.mrf.mxu0
  %v288 = vadd.f32 0.0, %v287
  %v289 = vpop.f32.mrf.mxu0
  %v290 = vadd.f32 0.0, %v289
  %291 = vmatmul.bf16.gmra.mxu0 %v120
  %v292 = vpop.f32.mrf.mxu0
  %v293 = vadd.f32 0.0, %v292
  %v294 = vpop.f32.mrf.mxu0
  %v295 = vadd.f32 0.0, %v294
  %296 = vmatmul.bf16.gmra.mxu0 %v122
  %v297 = vpop.f32.mrf.mxu0
  %v298 = vadd.f32 0.0, %v297
  %v299 = vpop.f32.mrf.mxu0
  %v300 = vadd.f32 0.0, %v299
  %301 = vmatmul.bf16.gmra.mxu0 %v124
  %v302 = vpop.f32.mrf.mxu0
  %v303 = vadd.f32 0.0, %v302
  %v304 = vpop.f32.mrf.mxu0
  %v305 = vadd.f32 0.0, %v304
  %306 = vdwg.mxu0
  %307 = vmatpush.bf16.msra.mxu0 %v256
  %308 = vmatpush.bf16.msra.mxu0 %v212
  %309 = vmatpush.bf16.msra.mxu0 %v211
  %310 = vmatpush.bf16.msra.mxu0 %v210
  %311 = vmatpush.bf16.msra.mxu0 %v209
  %312 = vmatpush.bf16.msra.mxu0 %v208
  %313 = vmatpush.bf16.msra.mxu0 %v207
  %314 = vmatpush.bf16.msra.mxu0 %v206
  %315 = vmatmul.bf16.gmra.mxu0 %v231
  %v316 = vpop.f32.mrf.mxu0
  %v317 = vadd.f32 %v268, %v316
  %v318 = vpop.f32.mrf.mxu0
  %v319 = vadd.f32 %v270, %v318
  %320 = vmatmul.bf16.gmra.mxu0 %v234
  %v321 = vpop.f32.mrf.mxu0
  %v322 = vadd.f32 %v273, %v321
  %v323 = vpop.f32.mrf.mxu0
  %v324 = vadd.f32 %v275, %v323
  %325 = vmatmul.bf16.gmra.mxu0 %v237
  %v326 = vpop.f32.mrf.mxu0
  %v327 = vadd.f32 %v278, %v326
  %v328 = vpop.f32.mrf.mxu0
  %v329 = vadd.f32 %v280, %v328
  %330 = vmatmul.bf16.gmra.mxu0 %v240
  %v331 = vpop.f32.mrf.mxu0
  %v332 = vadd.f32 %v283, %v331
  %v333 = vpop.f32.mrf.mxu0
  %v334 = vadd.f32 %v285, %v333
  %335 = vmatmul.bf16.gmra.mxu0 %v243
  %v336 = vpop.f32.mrf.mxu0
  %v337 = vadd.f32 %v288, %v336
  %v338 = vpop.f32.mrf.mxu0
  %v339 = vadd.f32 %v290, %v338
  %340 = vmatmul.bf16.gmra.mxu0 %v246
  %v341 = vpop.f32.mrf.mxu0
  %v342 = vadd.f32 %v293, %v341
  %v343 = vpop.f32.mrf.mxu0
  %v344 = vadd.f32 %v295, %v343
  %345 = vmatmul.bf16.gmra.mxu0 %v249
  %v346 = vpop.f32.mrf.mxu0
  %v347 = vadd.f32 %v298, %v346
  %v348 = vpop.f32.mrf.mxu0
  %v349 = vadd.f32 %v300, %v348
  %350 = vmatmul.bf16.gmra.mxu0 %v252
  %v351 = vpop.f32.mrf.mxu0
  %v352 = vadd.f32 %v303, %v351
  %v353 = vpop.f32.mrf.mxu0
  %v354 = vadd.f32 %v305, %v353
  %355 = vdwg.mxu0
  %v356 = vmax.f32 %v317, %v327
  %v357 = vmax.f32 %v356, %v337
  %v358 = vmax.f32 %v357, %v347
  %v359 = vmax.f32 %v319, %v329
  %v360 = vmax.f32 %v359, %v339
  %v361 = vmax.f32 %v360, %v349
  %v362 = vmax.f32 %v322, %v332
  %v363 = vmax.f32 %v362, %v342
  %v364 = vmax.f32 %v363, %v352
  %v365 = vmax.f32 %v324, %v334
  %v366 = vmax.f32 %v365, %v344
  %v367 = vmax.f32 %v366, %v354
  %v368 = vld [vmem:[%s2] sm:$0x1]
  %v370 = vperm.slane %v368, 0
  %v372 = vadd.f32 %v358, %v370
  %v373 = vadd.f32 %v361, %v370
  %v374 = vadd.f32 %v364, %v370
  %v375 = vadd.f32 %v367, %v370
  %v376 = vmax.f32 %v372, 0.0
  %v377 = vmax.f32 %v373, 0.0
  %v378 = vmax.f32 %v374, 0.0
  %v379 = vmax.f32 %v375, 0.0
  %v380 = vpack.c.bf16 %v376, %v376
  %v381 = vpack.c.bf16 %v377, %v377
  %v382 = vpack.c.bf16 %v378, %v378
  %v383 = vpack.c.bf16 %v379, %v379
  %384 = vst [vmem:[%s3] sm:$0xf] %v380
  %385 = vst [vmem:[%s3 + $0x4] sm:$0xf] %v381
  %386 = vst [vmem:[%s3 + $0x8] sm:$0xf] %v382
  %387 = vst [vmem:[%s3 + $0xc] sm:$0xf] %v383
  // Predicated region
  $region14: #{net_forward.4} parent=0 // pred_check
    _
  $region15: #{net_forward.4} parent=0 // pred_check_branch
    %389 = sbr.rel (0) target = $region17
  $region16: #{net_forward.4} parent=0 // pred_region
    _
  $region17: #{net_forward.4} parent=0 // pred_fallthru
    _
  // Predicated region
  $region18: #{net_forward.4} parent=0 // pred_check
    _
  $region19: #{net_forward.4} parent=0 // pred_check_branch
    %391 = sbr.rel (0) target = $region21
  $region20: #{net_forward.4} parent=0 // pred_region
    _
  $region21: #{net_forward.4} parent=0 // pred_fallthru
    _

// kernel: net_forward.5
$region0: #{net_forward.5}
  #allocation0 [shape = 'u32[]', space=smem, size = 0x4, offset = 0x4, fixed_abs, tag = 'smem constant byte address 0x4 - core index']
  #allocation1 [shape = 'u32[72,128]{1,0:T(1,128)}', space=vmem, size = 0x9000, scoped, tag = 'internal scratch']
  %s0 = inlined_call_operand.vmem [shape: bf16[16,320], index: 0, kind: input, shape index: {}]
  %s1 = inlined_call_operand.vmem [shape: bf16[320,128], index: 1, kind: input, shape index: {}]
  %s2 = inlined_call_operand.vmem [shape: f32[1,128], index: 2, kind: input, shape index: {}]
  %s3 = inlined_call_operand.vmem [shape: f32[16,128], index: 3, kind: output, shape index: {}]
  %s4 = sld [smem:[#allocation0]]
  $region22: #{net_forward.5} parent=0
    _
  %s6 = ssub.s32 1, %s4
  %s7 = scalar_select 0, %s6, %s4
  // Predicated region
  $region2: #{net_forward.5} parent=0 // pred_check
    _
  $region3: #{net_forward.5} parent=0 // pred_check_branch
    %9 = sbr.rel (0) target = $region5
  $region4: #{net_forward.5} parent=0 // pred_region
    _
  $region5: #{net_forward.5} parent=0 // pred_fallthru
    _
  // Predicated region
  $region6: #{net_forward.5} parent=0 // pred_check
    _
  $region7: #{net_forward.5} parent=0 // pred_check_branch
    %11 = sbr.rel (0) target = $region9
  $region8: #{net_forward.5} parent=0 // pred_region
    _
  $region9: #{net_forward.5} parent=0 // pred_fallthru
    _
  // Predicated region
  $region10: #{net_forward.5} parent=0 // pred_check
    _
  $region11: #{net_forward.5} parent=0 // pred_check_branch
    %13 = sbr.rel (0) target = $region13
  $region12: #{net_forward.5} parent=0 // pred_region
    _
  $region13: #{net_forward.5} parent=0 // pred_fallthru
    _
  %v15 = vld [vmem:[%s0] sm:$0xff]
  %v16 = vld [vmem:[%s0 + $0x8] sm:$0xf]
  %v17 = vld [vmem:[%s0 + $0xc] sm:$0xff]
  %v18 = vld [vmem:[%s0 + $0x14] sm:$0xf]
  %v19 = vld [vmem:[%s1] sm:$0xf]
  %v20 = vld [vmem:[%s1 + $0x4] sm:$0xf]
  %v21 = vld [vmem:[%s1 + $0x8] sm:$0xf]
  %v22 = vld [vmem:[%s1 + $0xc] sm:$0xf]
  %v23 = vld [vmem:[%s1 + $0x10] sm:$0xf]
  %v24 = vld [vmem:[%s1 + $0x14] sm:$0xf]
  %v25 = vld [vmem:[%s1 + $0x18] sm:$0xf]
  %v26 = vld [vmem:[%s1 + $0x1c] sm:$0xf]
  %v27 = vld [vmem:[%s1 + $0x20] sm:$0xf]
  %v28 = vld [vmem:[%s1 + $0x24] sm:$0xf]
  %v29 = vld [vmem:[%s1 + $0x28] sm:$0xf]
  %v30 = vld [vmem:[%s1 + $0x2c] sm:$0xf]
  %v31 = vld [vmem:[%s1 + $0x30] sm:$0xf]
  %v32 = vld [vmem:[%s1 + $0x34] sm:$0xf]
  %v33 = vld [vmem:[%s1 + $0x38] sm:$0xf]
  %v34 = vld [vmem:[%s1 + $0x3c] sm:$0xf]
  %v35 = vld [vmem:[%s1 + $0x40] sm:$0xf]
  %v36 = vld [vmem:[%s1 + $0x44] sm:$0xf]
  %v37 = vld [vmem:[%s1 + $0x48] sm:$0xf]
  %v38 = vld [vmem:[%s1 + $0x4c] sm:$0xf]
  %v39 = vld [vmem:[%s1 + $0x50] sm:$0xf]
  %v40 = vld [vmem:[%s1 + $0x54] sm:$0xf]
  %v41 = vld [vmem:[%s1 + $0x58] sm:$0xf]
  %v42 = vld [vmem:[%s1 + $0x5c] sm:$0xf]
  %v43 = vld [vmem:[%s1 + $0x60] sm:$0xf]
  %v44 = vld [vmem:[%s1 + $0x64] sm:$0xf]
  %v45 = vld [vmem:[%s1 + $0x68] sm:$0xf]
  %v46 = vld [vmem:[%s1 + $0x6c] sm:$0xf]
  %v47 = vld [vmem:[%s1 + $0x70] sm:$0xf]
  %v48 = vld [vmem:[%s1 + $0x74] sm:$0xf]
  %v49 = vld [vmem:[%s1 + $0x78] sm:$0xf]
  %v50 = vld [vmem:[%s1 + $0x7c] sm:$0xf]
  %v51 = vld [vmem:[%s1 + $0x80] sm:$0xf]
  %v52 = vld [vmem:[%s1 + $0x84] sm:$0xf]
  %v53 = vld [vmem:[%s1 + $0x88] sm:$0xf]
  %v54 = vld [vmem:[%s1 + $0x8c] sm:$0xf]
  %v55 = vld [vmem:[%s1 + $0x90] sm:$0xf]
  %v56 = vld [vmem:[%s1 + $0x94] sm:$0xf]
  %v57 = vld [vmem:[%s1 + $0x98] sm:$0xf]
  %v58 = vld [vmem:[%s1 + $0x9c] sm:$0xf]
  %v59 = vld [vmem:[%s2] sm:$0x1]
  %v61 = vperm.slane %v59, 0
  %v67 = vunpack.c.l.b16 %v15
  %v68 = vunpack.c.h.b16 %v15
  %v69 = vunpack.c.l.b16 %v16
  %v70 = vunpack.c.l.b16 %v17
  %v71 = vunpack.c.h.b16 %v17
  %v72 = vunpack.c.l.b16 %v18
  %v73 = vpack.c.b16 %v70, %v67
  %v74 = vpack.c.b16 %v71, %v68
  %v75 = vpack.c.b16 %v72, %v69
  %v118 = vunpack.c.l.b16 %v19
  %v119 = vunpack.c.l.b16 %v20
  %v120 = vunpack.c.l.b16 %v21
  %v121 = vunpack.c.l.b16 %v22
  %v122 = vunpack.c.l.b16 %v23
  %v123 = vunpack.c.l.b16 %v24
  %v124 = vunpack.c.l.b16 %v25
  %v125 = vunpack.c.l.b16 %v26
  %v126 = vunpack.c.l.b16 %v27
  %v127 = vunpack.c.l.b16 %v28
  %v128 = vunpack.c.l.b16 %v29
  %v129 = vunpack.c.l.b16 %v30
  %v130 = vunpack.c.l.b16 %v31
  %v131 = vunpack.c.l.b16 %v32
  %v132 = vunpack.c.l.b16 %v33
  %v133 = vunpack.c.l.b16 %v34
  %v134 = vunpack.c.l.b16 %v35
  %v135 = vunpack.c.l.b16 %v36
  %v136 = vunpack.c.l.b16 %v37
  %v137 = vunpack.c.l.b16 %v38
  %v138 = vunpack.c.l.b16 %v39
  %v139 = vunpack.c.l.b16 %v40
  %v140 = vunpack.c.l.b16 %v41
  %v141 = vunpack.c.l.b16 %v42
  %v142 = vunpack.c.l.b16 %v43
  %v143 = vunpack.c.l.b16 %v44
  %v144 = vunpack.c.l.b16 %v45
  %v145 = vunpack.c.l.b16 %v46
  %v146 = vunpack.c.l.b16 %v47
  %v147 = vunpack.c.l.b16 %v48
  %v148 = vunpack.c.l.b16 %v49
  %v149 = vunpack.c.l.b16 %v50
  %v150 = vunpack.c.l.b16 %v51
  %v151 = vunpack.c.l.b16 %v52
  %v152 = vunpack.c.l.b16 %v53
  %v153 = vunpack.c.l.b16 %v54
  %v154 = vunpack.c.l.b16 %v55
  %v155 = vunpack.c.l.b16 %v56
  %v156 = vunpack.c.l.b16 %v57
  %v157 = vunpack.c.l.b16 %v58
  %v158 = vpack.c.b16 %v119, %v118
  %v159 = vpack.c.b16 %v121, %v120
  %v160 = vpack.c.b16 %v123, %v122
  %v161 = vpack.c.b16 %v125, %v124
  %v162 = vpack.c.b16 %v127, %v126
  %v163 = vpack.c.b16 %v129, %v128
  %v164 = vpack.c.b16 %v131, %v130
  %v165 = vpack.c.b16 %v133, %v132
  %v166 = vpack.c.b16 %v135, %v134
  %v167 = vpack.c.b16 %v137, %v136
  %v168 = vpack.c.b16 %v139, %v138
  %v169 = vpack.c.b16 %v141, %v140
  %v170 = vpack.c.b16 %v143, %v142
  %v171 = vpack.c.b16 %v145, %v144
  %v172 = vpack.c.b16 %v147, %v146
  %v173 = vpack.c.b16 %v149, %v148
  %v174 = vpack.c.b16 %v151, %v150
  %v175 = vpack.c.b16 %v153, %v152
  %v176 = vpack.c.b16 %v155, %v154
  %v177 = vpack.c.b16 %v157, %v156
  %vm198 = vcmask 523264
  %v200 = vsel %vm198, %v75, 0
  %202 = vmatpush.bf16.msra.mxu0 %v165
  %203 = vmatpush.bf16.msra.mxu0 %v164
  %204 = vmatpush.bf16.msra.mxu0 %v163
  %205 = vmatpush.bf16.msra.mxu0 %v162
  %206 = vmatpush.bf16.msra.mxu0 %v161
  %207 = vmatpush.bf16.msra.mxu0 %v160
  %208 = vmatpush.bf16.msra.mxu0 %v159
  %209 = vmatpush.bf16.msra.mxu0 %v158
  %210 = vmatmul.bf16.gmra.mxu0 %v73
  %v211 = vpop.f32.mrf.mxu0
  %v212 = vadd.f32 %v61, %v211
  %v213 = vpop.f32.mrf.mxu0
  %v214 = vadd.f32 %v61, %v213
  %215 = vdwg.mxu0
  %216 = vmatpush.bf16.msra.mxu0 %v173
  %217 = vmatpush.bf16.msra.mxu0 %v172
  %218 = vmatpush.bf16.msra.mxu0 %v171
  %219 = vmatpush.bf16.msra.mxu0 %v170
  %220 = vmatpush.bf16.msra.mxu0 %v169
  %221 = vmatpush.bf16.msra.mxu0 %v168
  %222 = vmatpush.bf16.msra.mxu0 %v167
  %223 = vmatpush.bf16.msra.mxu0 %v166
  %224 = vmatmul.bf16.gmra.mxu0 %v74
  %v225 = vpop.f32.mrf.mxu0
  %v226 = vadd.f32 %v212, %v225
  %v227 = vpop.f32.mrf.mxu0
  %v228 = vadd.f32 %v214, %v227
  %229 = vdwg.mxu0
  %230 = vmatpush.bf16.msra.mxu0 0
  %231 = vmatpush.bf16.msra.mxu0 0
  %232 = vmatpush.bf16.msra.mxu0 0
  %233 = vmatpush.bf16.msra.mxu0 0
  %234 = vmatpush.bf16.msra.mxu0 %v177
  %235 = vmatpush.bf16.msra.mxu0 %v176
  %236 = vmatpush.bf16.msra.mxu0 %v175
  %237 = vmatpush.bf16.msra.mxu0 %v174
  %238 = vmatmul.bf16.gmra.mxu0 %v200
  %v239 = vpop.f32.mrf.mxu0
  %v240 = vadd.f32 %v226, %v239
  %v241 = vpop.f32.mrf.mxu0
  %v242 = vadd.f32 %v228, %v241
  %243 = vdwg.mxu0
  %244 = vst [vmem:[%s3] sm:$0xff] %v240
  %245 = vst [vmem:[%s3 + $0x8] sm:$0xff] %v242
  // Predicated region
  $region14: #{net_forward.5} parent=0 // pred_check
    _
  $region15: #{net_forward.5} parent=0 // pred_check_branch
    %247 = sbr.rel (0) target = $region17
  $region16: #{net_forward.5} parent=0 // pred_region
    _
  $region17: #{net_forward.5} parent=0 // pred_fallthru
    _
  // Predicated region
  $region18: #{net_forward.5} parent=0 // pred_check
    _
  $region19: #{net_forward.5} parent=0 // pred_check_branch
    %249 = sbr.rel (0) target = $region21
  $region20: #{net_forward.5} parent=0 // pred_region
    _
  $region21: #{net_forward.5} parent=0 // pred_fallthru
    _

</llo_original>
